<compile_context>
chip_gen: v5e
topology: v5e:2x2
jax: 0.10.0
libtpu: 0.0.40
codegen_flags: <defaults>
</compile_context>

<pallas_src>
import jax
import jax.numpy as jnp
from jax.experimental import pallas as pl
from jax.experimental.pallas import tpu as pltpu


# ----------------------------------------------------------------------------
# Pallas kernel factory: the whole Mapper MLP stack for one (batch, L-tile)
# block in channel-major layout.  x block: (C_in, TILE_L); out: (C_out, TILE_L).
# ----------------------------------------------------------------------------
def _make_mapper_kernel(layer_dims, n_mid):
    """layer_dims: tuple of (cout, cin) for the 3*n_mid+1 folded conv layers,
    ordered [convblock, res_conv1, res_conv2] * n_mid + [final]."""

    def kernel(x_ref, w_ref, b_ref, o_ref):
        # Tiny packed parameter slabs; grid-invariant -> stay VMEM resident.
        W = w_ref[...]            # (n_layers, Cmax, Cmax)  bf16
        Bv = b_ref[...]           # (n_layers, Cmax, 1)     f32

        def affine(li, a):
            co, ci = layer_dims[li]
            z = jnp.dot(W[li, :co, :ci], a, preferred_element_type=jnp.float32)
            return z + Bv[li, :co, :]            # f32 accumulator + f32 bias

        # bf16 MXU operands, f32 accumulation; exactly one f32->bf16 cast per
        # activation (right after its ReLU) so the cast result both feeds the
        # next dot and is what round-trips VMEM at large TILE_L.
        h = x_ref[...].astype(jnp.bfloat16)                       # (C_in, T)
        li = 0
        for _ in range(n_mid):
            # ConvBlock1d: Conv1d(k=1) -> BN -> ReLU (BN folded).
            h = jnp.maximum(affine(li, h), 0.0).astype(jnp.bfloat16)
            li += 1
            # ResidualBlock1d: relu(h + bn(conv(relu(bn(conv(h)))))).
            r = jnp.maximum(affine(li, h), 0.0).astype(jnp.bfloat16)
            li += 1
            z = affine(li, r)
            li += 1
            # Residual add + ReLU in f32 (dot accumulator dtype), one downcast.
            h = jnp.maximum(h.astype(jnp.float32) + z, 0.0).astype(jnp.bfloat16)

        # Final Conv1d(bias=True) + trailing BatchNorm1d (folded together).
        y = affine(li, h)
        o_ref[...] = y.astype(o_ref.dtype)                        # (C_out, T)

    return kernel


# ----------------------------------------------------------------------------
# Plain-JAX glue: BN folding, parameter packing, pallas_call setup.
# ----------------------------------------------------------------------------
def fold_conv_bn(w, b, gamma, beta, mean, var, eps=1e-5):
    """Fold Conv1d(k=1) weight (Cout, Cin) + bias (Cout,) with eval-mode BN.
    Returns W (Cout, Cin) and bias (Cout, 1) for y = W @ x + b on (C, L)."""
    s = gamma / jnp.sqrt(var + eps)
    w_f = (w * s[:, None]).astype(jnp.float32)
    b_f = ((b - mean) * s + beta).astype(jnp.float32)
    return w_f, b_f[:, None]


def pack_params(folded_params, weight_dtype=jnp.bfloat16):
    """Pack all folded (W, b) pairs into one weight slab and one bias slab."""
    n = len(folded_params)
    cmax = max(max(w.shape) for w, _ in folded_params)
    cmax = ((cmax + 7) // 8) * 8          # sublane-align the padded slab dims
    W = jnp.zeros((n, cmax, cmax), weight_dtype)
    B = jnp.zeros((n, cmax, 1), jnp.float32)
    dims = []
    for i, (w, b) in enumerate(folded_params):
        co, ci = w.shape
        W = W.at[i, :co, :ci].set(w.astype(weight_dtype))
        B = B.at[i, :co, :].set(b.astype(jnp.float32))
        dims.append((co, ci))
    return W, B, tuple(dims)


def mapper_forward(x_ncl, folded_params, out_channels, tile_l=16384,
                   out_dtype=None, weight_dtype=jnp.bfloat16):
    """x_ncl: (N, C_in, L) -> (N, out_channels, L).

    Channel-major kernel, lane-dense I/O along L.  For v6e/v7x bandwidth you
    may pass a bf16 x and out_dtype=jnp.bfloat16; accumulation remains f32.
    """
    N, C, L = x_ncl.shape
    out_dtype = out_dtype if out_dtype is not None else x_ncl.dtype
    n_mid = (len(folded_params) - 1) // 3
    assert len(folded_params) == 3 * n_mid + 1

    W, Bv, dims = pack_params(folded_params, weight_dtype)
    n_layers, cmax, _ = W.shape

    # ---- L-tile selection (generation-aware caps) --------------------------
    MAX_TILE_L = 32768            # with the 48 MiB VMEM limit, safe on v5e/v6e/v7x
    tile_l = int(min(tile_l, MAX_TILE_L))
    if N < 2:
        # Guarantee >= 4 L tiles when the batch axis can't feed both v7x cores.
        tile_l = min(tile_l, -(-L // 4))
    tile_l = min(tile_l, L)
    tile_l = max(128, (tile_l // 128) * 128)   # lane-width multiple
    num_l = pl.cdiv(L, tile_l)    # ragged tail handled by Pallas block padding

    kernel = _make_mapper_kernel(dims, n_mid)

    return pl.pallas_call(
        kernel,
        out_shape=jax.ShapeDtypeStruct((N, out_channels, L), out_dtype),
        grid_spec=pltpu.PrefetchScalarGridSpec(
            num_scalar_prefetch=0,
            grid=(N, num_l),
            in_specs=[
                pl.BlockSpec((None, C, tile_l), lambda n, l: (n, 0, l)),
                # Packed weight / bias slabs: grid-constant, VMEM-resident.
                pl.BlockSpec((n_layers, cmax, cmax), lambda n, l: (0, 0, 0)),
                pl.BlockSpec((n_layers, cmax, 1), lambda n, l: (0, 0, 0)),
            ],
            out_specs=pl.BlockSpec((None, out_channels, tile_l),
                                   lambda n, l: (n, 0, l)),
        ),
        compiler_params=pltpu.CompilerParams(
            dimension_semantics=("parallel", "parallel"),
            vmem_limit_bytes=48 * 1024 * 1024,
        ),
    )(x_ncl, W, Bv)


# ----------------------------------------------------------------------------
# Deterministic parameter construction (synthetic, no checkpoint load).
# ----------------------------------------------------------------------------
def make_params(key, in_channels, mid_channels, out_channels):
    def conv_bn(key, cin, cout, conv_bias):
        ks = jax.random.split(key, 6)
        w = 0.1 * jax.random.normal(ks[0], (cout, cin), jnp.float32)
        b = (0.05 * jax.random.normal(ks[1], (cout,), jnp.float32)
             if conv_bias else jnp.zeros((cout,), jnp.float32))
        gamma = 1.0 + 0.2 * jax.random.normal(ks[2], (cout,), jnp.float32)
        beta = 0.1 * jax.random.normal(ks[3], (cout,), jnp.float32)
        mean = 0.05 * jax.random.normal(ks[4], (cout,), jnp.float32)
        var = 1.0 + 0.1 * jnp.abs(jax.random.normal(ks[5], (cout,), jnp.float32))
        return fold_conv_bn(w, b, gamma, beta, mean, var)

    folded = []
    prev = in_channels
    keys = jax.random.split(key, 3 * len(mid_channels) + 1)
    k_i = 0
    for mc in mid_channels:
        folded.append(conv_bn(keys[k_i], prev, mc, conv_bias=False)); k_i += 1   # ConvBlock1d
        folded.append(conv_bn(keys[k_i], mc, mc, conv_bias=False)); k_i += 1     # Residual conv1+BN
        folded.append(conv_bn(keys[k_i], mc, mc, conv_bias=False)); k_i += 1     # Residual conv2+BN
        prev = mc
    # Final Conv1d(bias=True) + trailing BatchNorm1d, folded together.
    folded.append(conv_bn(keys[k_i], prev, out_channels, conv_bias=True))
    return folded


def reference_forward(x_ncl, folded_params):
    """Pure-jnp f32 reference (same folded params, no bf16 rounding)."""
    def lin(w, b, x):
        return jnp.einsum('oc,ncl->nol', w, x) + b[None]

    n_mid = (len(folded_params) - 1) // 3
    h = x_ncl
    idx = 0
    for _ in range(n_mid):
        w, b = folded_params[idx]; idx += 1
        h = jnp.maximum(lin(w, b, h), 0.0)
        w, b = folded_params[idx]; idx += 1
        r = jnp.maximum(lin(w, b, h), 0.0)
        w, b = folded_params[idx]; idx += 1
        h = jnp.maximum(h + lin(w, b, r), 0.0)
    w, b = folded_params[idx]
    return lin(w, b, h)


if __name__ == "__main__":
    # Small shapes consistent with Mapper(in_channels=6, out_channels=8,
    # mid_channels=[16, 32]).
    in_channels, out_channels = 6, 8
    mid_channels = [16, 32]
    N, L = 2, 768  # batch, number of correspondences

    key = jax.random.PRNGKey(0)
    k_x, k_p = jax.random.split(key)
    x = jax.random.normal(k_x, (N, in_channels, L), jnp.float32)

    params = make_params(k_p, in_channels, mid_channels, out_channels)
    y_ref = reference_forward(x, params)
    scale = jnp.max(jnp.abs(y_ref)) + 1e-6

    # 1) Default path: f32 I/O, bf16 weights/activations inside, single L tile.
    y = jax.block_until_ready(mapper_forward(x, params, out_channels))
    assert y.shape == (N, out_channels, L)
    # bf16 operands -> loosened tolerance (per review), normalized by output scale.
    assert float(jnp.max(jnp.abs(y - y_ref)) / scale) < 5e-2

    # 2) Multi-tile path with a ragged tail (768 = 512 + 256 partial block) and
    #    bf16 streaming I/O (the v6e/v7x bandwidth recommendation).
    y2 = jax.block_until_ready(
        mapper_forward(x.astype(jnp.bfloat16), params, out_channels,
                       tile_l=512, out_dtype=jnp.bfloat16))
    assert y2.dtype == jnp.bfloat16 and y2.shape == (N, out_channels, L)
    assert float(jnp.max(jnp.abs(y2.astype(jnp.float32) - y_ref)) / scale) < 1e-1

    print("KERNEL_OK")
</pallas_src>

<mosaic_0001>
module attributes {stable_mosaic.version = 11 : i64} {
  func.func @kernel(%arg0: i32, %arg1: i32, %arg2: memref<1x6x768xf32, #tpu.memory_space<vmem>>, %arg3: memref<7x32x32xbf16, #tpu.memory_space<vmem>>, %arg4: memref<7x32x1xf32, #tpu.memory_space<vmem>>, %arg5: memref<1x8x768xf32, #tpu.memory_space<vmem>>) attributes {dimension_semantics = [#tpu.dimension_semantics<parallel>, #tpu.dimension_semantics<parallel>], iteration_bounds = array<i64: 2, 1>, scalar_prefetch = 0 : i64, scratch_operands = 0 : i64, tpu.core_type = #tpu.core_type<tc>, window_params = [{transform_indices = @transform_0, window_bounds = array<i64: 1, 6, 768>}, {pipeline_mode = #tpu.pipeline_mode<synchronous>, transform_indices = @transform_1, window_bounds = array<i64: 7, 32, 32>}, {pipeline_mode = #tpu.pipeline_mode<synchronous>, transform_indices = @transform_2, window_bounds = array<i64: 7, 32, 1>}, {transform_indices = @transform_3, window_bounds = array<i64: 1, 8, 768>}]} {
    %c0 = arith.constant 0 : index
    %c0_0 = arith.constant 0 : index
    %c0_1 = arith.constant 0 : index
    %0 = vector.load %arg3[%c0, %c0_0, %c0_1] : memref<7x32x32xbf16, #tpu.memory_space<vmem>>, vector<7x32x32xbf16>
    %c0_2 = arith.constant 0 : index
    %c0_3 = arith.constant 0 : index
    %c0_4 = arith.constant 0 : index
    %1 = vector.load %arg4[%c0_2, %c0_3, %c0_4] : memref<7x32x1xf32, #tpu.memory_space<vmem>>, vector<7x32x1xf32>
    %c0_5 = arith.constant 0 : index
    %c0_6 = arith.constant 0 : index
    %c0_7 = arith.constant 0 : index
    %2 = vector.load %arg2[%c0_5, %c0_6, %c0_7] : memref<1x6x768xf32, #tpu.memory_space<vmem>>, vector<1x6x768xf32>
    %3 = vector.shape_cast %2 : vector<1x6x768xf32> to vector<6x768xf32>
    %4 = arith.truncf %3 : vector<6x768xf32> to vector<6x768xbf16>
    %5 = vector.extract_strided_slice %0 {offsets = [0, 0, 0], sizes = [1, 16, 6], strides = [1, 1, 1]} : vector<7x32x32xbf16> to vector<1x16x6xbf16>
    %6 = vector.shape_cast %5 : vector<1x16x6xbf16> to vector<16x6xbf16>
    %cst = arith.constant dense<0.000000e+00> : vector<16x768xf32>
    %7 = tpu.matmul %6, %4, %cst {dimension_numbers = #tpu.dot_dimension_numbers<[1], [0], [0], [1], [0, 0, 1, 1], [], []>} : vector<16x6xbf16>, vector<6x768xbf16>, vector<16x768xf32> -> vector<16x768xf32>
    %8 = vector.extract_strided_slice %1 {offsets = [0, 0, 0], sizes = [1, 16, 1], strides = [1, 1, 1]} : vector<7x32x1xf32> to vector<1x16x1xf32>
    %9 = vector.shape_cast %8 : vector<1x16x1xf32> to vector<16x1xf32>
    %10 = vector.broadcast %9 : vector<16x1xf32> to vector<16x768xf32>
    %11 = arith.addf %7, %10 : vector<16x768xf32>
    %cst_8 = arith.constant 0.000000e+00 : f32
    %12 = vector.broadcast %cst_8 : f32 to vector<16x768xf32>
    %13 = arith.maximumf %11, %12 : vector<16x768xf32>
    %14 = arith.truncf %13 : vector<16x768xf32> to vector<16x768xbf16>
    %15 = vector.extract_strided_slice %0 {offsets = [1, 0, 0], sizes = [1, 16, 16], strides = [1, 1, 1]} : vector<7x32x32xbf16> to vector<1x16x16xbf16>
    %16 = vector.shape_cast %15 : vector<1x16x16xbf16> to vector<16x16xbf16>
    %cst_9 = arith.constant dense<0.000000e+00> : vector<16x768xf32>
    %17 = tpu.matmul %16, %14, %cst_9 {dimension_numbers = #tpu.dot_dimension_numbers<[1], [0], [0], [1], [0, 0, 1, 1], [], []>} : vector<16x16xbf16>, vector<16x768xbf16>, vector<16x768xf32> -> vector<16x768xf32>
    %18 = vector.extract_strided_slice %1 {offsets = [1, 0, 0], sizes = [1, 16, 1], strides = [1, 1, 1]} : vector<7x32x1xf32> to vector<1x16x1xf32>
    %19 = vector.shape_cast %18 : vector<1x16x1xf32> to vector<16x1xf32>
    %20 = vector.broadcast %19 : vector<16x1xf32> to vector<16x768xf32>
    %21 = arith.addf %17, %20 : vector<16x768xf32>
    %cst_10 = arith.constant 0.000000e+00 : f32
    %22 = vector.broadcast %cst_10 : f32 to vector<16x768xf32>
    %23 = arith.maximumf %21, %22 : vector<16x768xf32>
    %24 = arith.truncf %23 : vector<16x768xf32> to vector<16x768xbf16>
    %25 = vector.extract_strided_slice %0 {offsets = [2, 0, 0], sizes = [1, 16, 16], strides = [1, 1, 1]} : vector<7x32x32xbf16> to vector<1x16x16xbf16>
    %26 = vector.shape_cast %25 : vector<1x16x16xbf16> to vector<16x16xbf16>
    %cst_11 = arith.constant dense<0.000000e+00> : vector<16x768xf32>
    %27 = tpu.matmul %26, %24, %cst_11 {dimension_numbers = #tpu.dot_dimension_numbers<[1], [0], [0], [1], [0, 0, 1, 1], [], []>} : vector<16x16xbf16>, vector<16x768xbf16>, vector<16x768xf32> -> vector<16x768xf32>
    %28 = vector.extract_strided_slice %1 {offsets = [2, 0, 0], sizes = [1, 16, 1], strides = [1, 1, 1]} : vector<7x32x1xf32> to vector<1x16x1xf32>
    %29 = vector.shape_cast %28 : vector<1x16x1xf32> to vector<16x1xf32>
    %30 = vector.broadcast %29 : vector<16x1xf32> to vector<16x768xf32>
    %31 = arith.addf %27, %30 : vector<16x768xf32>
    %32 = arith.extf %14 : vector<16x768xbf16> to vector<16x768xf32>
    %33 = arith.addf %32, %31 : vector<16x768xf32>
    %cst_12 = arith.constant 0.000000e+00 : f32
    %34 = vector.broadcast %cst_12 : f32 to vector<16x768xf32>
    %35 = arith.maximumf %33, %34 : vector<16x768xf32>
    %36 = arith.truncf %35 : vector<16x768xf32> to vector<16x768xbf16>
    %37 = vector.extract_strided_slice %0 {offsets = [3, 0, 0], sizes = [1, 32, 16], strides = [1, 1, 1]} : vector<7x32x32xbf16> to vector<1x32x16xbf16>
    %38 = vector.shape_cast %37 : vector<1x32x16xbf16> to vector<32x16xbf16>
    %cst_13 = arith.constant dense<0.000000e+00> : vector<32x768xf32>
    %39 = tpu.matmul %38, %36, %cst_13 {dimension_numbers = #tpu.dot_dimension_numbers<[1], [0], [0], [1], [0, 0, 1, 1], [], []>} : vector<32x16xbf16>, vector<16x768xbf16>, vector<32x768xf32> -> vector<32x768xf32>
    %40 = vector.extract_strided_slice %1 {offsets = [3, 0, 0], sizes = [1, 32, 1], strides = [1, 1, 1]} : vector<7x32x1xf32> to vector<1x32x1xf32>
    %41 = vector.shape_cast %40 : vector<1x32x1xf32> to vector<32x1xf32>
    %42 = vector.broadcast %41 : vector<32x1xf32> to vector<32x768xf32>
    %43 = arith.addf %39, %42 : vector<32x768xf32>
    %cst_14 = arith.constant 0.000000e+00 : f32
    %44 = vector.broadcast %cst_14 : f32 to vector<32x768xf32>
    %45 = arith.maximumf %43, %44 : vector<32x768xf32>
    %46 = arith.truncf %45 : vector<32x768xf32> to vector<32x768xbf16>
    %47 = vector.extract_strided_slice %0 {offsets = [4, 0, 0], sizes = [1, 32, 32], strides = [1, 1, 1]} : vector<7x32x32xbf16> to vector<1x32x32xbf16>
    %48 = vector.shape_cast %47 : vector<1x32x32xbf16> to vector<32x32xbf16>
    %cst_15 = arith.constant dense<0.000000e+00> : vector<32x768xf32>
    %49 = tpu.matmul %48, %46, %cst_15 {dimension_numbers = #tpu.dot_dimension_numbers<[1], [0], [0], [1], [0, 0, 1, 1], [], []>} : vector<32x32xbf16>, vector<32x768xbf16>, vector<32x768xf32> -> vector<32x768xf32>
    %50 = vector.extract_strided_slice %1 {offsets = [4, 0, 0], sizes = [1, 32, 1], strides = [1, 1, 1]} : vector<7x32x1xf32> to vector<1x32x1xf32>
    %51 = vector.shape_cast %50 : vector<1x32x1xf32> to vector<32x1xf32>
    %52 = vector.broadcast %51 : vector<32x1xf32> to vector<32x768xf32>
    %53 = arith.addf %49, %52 : vector<32x768xf32>
    %cst_16 = arith.constant 0.000000e+00 : f32
    %54 = vector.broadcast %cst_16 : f32 to vector<32x768xf32>
    %55 = arith.maximumf %53, %54 : vector<32x768xf32>
    %56 = arith.truncf %55 : vector<32x768xf32> to vector<32x768xbf16>
    %57 = vector.extract_strided_slice %0 {offsets = [5, 0, 0], sizes = [1, 32, 32], strides = [1, 1, 1]} : vector<7x32x32xbf16> to vector<1x32x32xbf16>
    %58 = vector.shape_cast %57 : vector<1x32x32xbf16> to vector<32x32xbf16>
    %cst_17 = arith.constant dense<0.000000e+00> : vector<32x768xf32>
    %59 = tpu.matmul %58, %56, %cst_17 {dimension_numbers = #tpu.dot_dimension_numbers<[1], [0], [0], [1], [0, 0, 1, 1], [], []>} : vector<32x32xbf16>, vector<32x768xbf16>, vector<32x768xf32> -> vector<32x768xf32>
    %60 = vector.extract_strided_slice %1 {offsets = [5, 0, 0], sizes = [1, 32, 1], strides = [1, 1, 1]} : vector<7x32x1xf32> to vector<1x32x1xf32>
    %61 = vector.shape_cast %60 : vector<1x32x1xf32> to vector<32x1xf32>
    %62 = vector.broadcast %61 : vector<32x1xf32> to vector<32x768xf32>
    %63 = arith.addf %59, %62 : vector<32x768xf32>
    %64 = arith.extf %46 : vector<32x768xbf16> to vector<32x768xf32>
    %65 = arith.addf %64, %63 : vector<32x768xf32>
    %cst_18 = arith.constant 0.000000e+00 : f32
    %66 = vector.broadcast %cst_18 : f32 to vector<32x768xf32>
    %67 = arith.maximumf %65, %66 : vector<32x768xf32>
    %68 = arith.truncf %67 : vector<32x768xf32> to vector<32x768xbf16>
    %69 = vector.extract_strided_slice %0 {offsets = [6, 0, 0], sizes = [1, 8, 32], strides = [1, 1, 1]} : vector<7x32x32xbf16> to vector<1x8x32xbf16>
    %70 = vector.shape_cast %69 : vector<1x8x32xbf16> to vector<8x32xbf16>
    %cst_19 = arith.constant dense<0.000000e+00> : vector<8x768xf32>
    %71 = tpu.matmul %70, %68, %cst_19 {dimension_numbers = #tpu.dot_dimension_numbers<[1], [0], [0], [1], [0, 0, 1, 1], [], []>} : vector<8x32xbf16>, vector<32x768xbf16>, vector<8x768xf32> -> vector<8x768xf32>
    %72 = vector.extract_strided_slice %1 {offsets = [6, 0, 0], sizes = [1, 8, 1], strides = [1, 1, 1]} : vector<7x32x1xf32> to vector<1x8x1xf32>
    %73 = vector.shape_cast %72 : vector<1x8x1xf32> to vector<8x1xf32>
    %74 = vector.broadcast %73 : vector<8x1xf32> to vector<8x768xf32>
    %75 = arith.addf %71, %74 : vector<8x768xf32>
    %c0_20 = arith.constant 0 : index
    %c0_21 = arith.constant 0 : index
    %c0_22 = arith.constant 0 : index
    %76 = vector.load %arg5[%c0_20, %c0_21, %c0_22] : memref<1x8x768xf32, #tpu.memory_space<vmem>>, vector<1x8x768xf32>
    %77 = vector.shape_cast %76 : vector<1x8x768xf32> to vector<8x768xf32>
    %78 = vector.shape_cast %75 : vector<8x768xf32> to vector<1x8x768xf32>
    tpu.vector_store %arg5[%c0_20, %c0_21, %c0_22], %78 {strides = array<i32>} : memref<1x8x768xf32, #tpu.memory_space<vmem>>, vector<1x8x768xf32>,
    return
  }
  func.func @transform_0(%arg0: i32, %arg1: i32) -> (i32, i32, i32) {
    %c0_i32 = arith.constant 0 : i32
    %c0_i32_0 = arith.constant 0 : i32
    return %arg0, %c0_i32, %arg1 : i32, i32, i32
  }
  func.func @transform_1(%arg0: i32, %arg1: i32) -> (i32, i32, i32) {
    %c0_i32 = arith.constant 0 : i32
    %c0_i32_0 = arith.constant 0 : i32
    %c0_i32_1 = arith.constant 0 : i32
    %c0_i32_2 = arith.constant 0 : i32
    return %c0_i32, %c0_i32_0, %c0_i32_1 : i32, i32, i32
  }
  func.func @transform_2(%arg0: i32, %arg1: i32) -> (i32, i32, i32) {
    %c0_i32 = arith.constant 0 : i32
    %c0_i32_0 = arith.constant 0 : i32
    %c0_i32_1 = arith.constant 0 : i32
    %c0_i32_2 = arith.constant 0 : i32
    return %c0_i32, %c0_i32_0, %c0_i32_1 : i32, i32, i32
  }
  func.func @transform_3(%arg0: i32, %arg1: i32) -> (i32, i32, i32) {
    %c0_i32 = arith.constant 0 : i32
    %c0_i32_0 = arith.constant 0 : i32
    return %arg0, %c0_i32, %arg1 : i32, i32, i32
  }
}

</mosaic_0001>

<llo_original>
// kernel: tpu_custom_call.1
$region0: #{tpu_custom_call.1}
  #allocation0 [shape = 'u32[]', space=smem, size = 0x4, offset = 0x4, fixed_abs, tag = 'smem constant byte address 0x4 - core index']
  #allocation1 [shape = 'u32[72,128]{1,0:T(1,128)}', space=vmem, size = 0x9000, scoped, tag = 'internal scratch']
  %s0 = inlined_call_operand.vmem [shape: f32[2,6,768], index: 0, kind: input, shape index: {}]
  %s1 = inlined_call_operand.vmem [shape: bf16[7,32,32], index: 1, kind: input, shape index: {}]
  %s2 = inlined_call_operand.vmem [shape: f32[7,32,1], index: 2, kind: input, shape index: {}]
  %s3 = inlined_call_operand.hbm [shape: f32[2,8,768], index: 3, kind: output, shape index: {}]
  %s4 = sld [smem:[#allocation0]]
  $region45: #{tpu_custom_call.1} parent=0
    _
  %s6 = ssub.s32 1, %s4
  %s7 = scalar_select 0, %s6, %s4
  $region1: #{tpu_custom_call.1} parent=0
    #allocation2 [shape = 'u8[49152]{0}', space=vmem, size = 0xc000, scoped, tag = 'output window, operand 0']
    #allocation3 [shape = 's32[2]{0}', space=sflag, size = 0x8, scoped, tag = 'scoped memory for tpu_custom_call.1']
    %8 = vsyncpa [#allocation3], 0
    %s9 = scalar_lea.sflag [#allocation3], 1
    %10 = vsyncpa %s9, 0
    loop: start=0, step=1, limit=4
    $region2: #{tpu_custom_call.1} parent=1 // loop_pre_header
      _
    $region3: #{tpu_custom_call.1} parent=1 // loop_header
      %s12 = sphi 0, %s16
      %p13 = scmp.ge.s32.totalorder %s12, 4
      %s19 = sphi 0, %s31
      %s20 = sphi 0, %s27
      %s21 = sphi 0, %s19
      %s22 = sphi 0, %s20
      %s23 = sphi 0, %s21
      %s24 = sphi 0, %s22
      %s36 = sphi 0, %s38
      %s39 = sphi 0, %s36
      %s40 = sphi 0, %s39
      %s56 = sphi 0, %s40
      %s60 = sphi 0, %s60
      %s62 = sphi 0, %s60
      %s63 = sphi 0, %s62
      %s77 = sphi 0, %s63
      %s81 = sphi 0, %s81
      %s83 = sphi 0, %s81
      %s84 = sphi 0, %s83
      %s98 = sphi 0, %s84
      %s106 = sphi 0, %s108
      %s109 = sphi 0, %s106
      %s110 = sphi 0, %s109
      %s126 = sphi 0, %s110
    $region4: #{tpu_custom_call.1} parent=1 // loop_header_branch
      %15 = sbr.rel (%p13) target = $region8
    $region5: #{tpu_custom_call.1} parent=1 // loop_body
      %s17 = ssub.s32 %s12, 1
      %s18 = ssub.s32 %s12, 2
      %s25 = sadd.s32 1, %s20
      %p26 = scmp.ge.s32.totalorder %s25, 1
      %s27 = scalar_select %p26, 0, %s25
      %s28 = sadd.s32 1, %s19
      %s29 = scalar_select %p26, %s28, %s19
      %p30 = scmp.ge.s32.totalorder %s29, 2
      %s31 = scalar_select %p30, 0, %s29
      %s32 = ssub.s32 %s19, %s31
      %s33 = ssub.s32 %s20, %s27
      %s34 = sor.u32 %s32, %s33
      %p35 = scmp.eq.s32.totalorder %s34, 0
      %s37 = sadd.s32 %s36, 1
      %s38 = scalar_select %p35, %s36, %s37
      %p41 = pneg %p35
      %p42 = scmp.eq.s32.totalorder %s12, 1
      %p43 = por %p41, %p42
      %p44 = scmp.ne.s32.totalorder %s36, %s39
      %p45 = scmp.eq.s32.totalorder %s12, 0
      %p46 = por %p44, %p45
      %p47 = scmp.ne.s32.totalorder %s36, %s39
      %p48 = scmp.eq.s32.totalorder %s17, 1
      %p49 = por %p47, %p48
      %p50 = scmp.ne.s32.totalorder %s39, %s40
      %p51 = scmp.eq.s32.totalorder %s17, 0
      %p52 = por %p50, %p51
      %p53 = scmp.ne.s32.totalorder %s39, %s40
      %p54 = scmp.eq.s32.totalorder %s18, 1
      %p55 = por %p53, %p54
      %p57 = scmp.ne.s32.totalorder %s40, %s56
      %p58 = scmp.eq.s32.totalorder %s18, 0
      %p59 = por %p57, %p58
      %s61 = sadd.s32 %s60, 1
      %p64 = scmp.eq.s32.totalorder %s12, 1
      %p65 = scmp.ne.s32.totalorder %s60, %s62
      %p66 = scmp.eq.s32.totalorder %s12, 0
      %p67 = por %p65, %p66
      %p68 = scmp.ne.s32.totalorder %s60, %s62
      %p69 = scmp.eq.s32.totalorder %s17, 1
      %p70 = por %p68, %p69
      %p71 = scmp.ne.s32.totalorder %s62, %s63
      %p72 = scmp.eq.s32.totalorder %s17, 0
      %p73 = por %p71, %p72
      %p74 = scmp.ne.s32.totalorder %s62, %s63
      %p75 = scmp.eq.s32.totalorder %s18, 1
      %p76 = por %p74, %p75
      %p78 = scmp.ne.s32.totalorder %s63, %s77
      %p79 = scmp.eq.s32.totalorder %s18, 0
      %p80 = por %p78, %p79
      %s82 = sadd.s32 %s81, 1
      %p85 = scmp.eq.s32.totalorder %s12, 1
      %p86 = scmp.ne.s32.totalorder %s81, %s83
      %p87 = scmp.eq.s32.totalorder %s12, 0
      %p88 = por %p86, %p87
      %p89 = scmp.ne.s32.totalorder %s81, %s83
      %p90 = scmp.eq.s32.totalorder %s17, 1
      %p91 = por %p89, %p90
      %p92 = scmp.ne.s32.totalorder %s83, %s84
      %p93 = scmp.eq.s32.totalorder %s17, 0
      %p94 = por %p92, %p93
      %p95 = scmp.ne.s32.totalorder %s83, %s84
      %p96 = scmp.eq.s32.totalorder %s18, 1
      %p97 = por %p95, %p96
      %p99 = scmp.ne.s32.totalorder %s84, %s98
      %p100 = scmp.eq.s32.totalorder %s18, 0
      %p101 = por %p99, %p100
      %s102 = ssub.s32 %s19, %s31
      %s103 = ssub.s32 %s20, %s27
      %s104 = sor.u32 %s102, %s103
      %p105 = scmp.eq.s32.totalorder %s104, 0
      %s107 = sadd.s32 %s106, 1
      %s108 = scalar_select %p105, %s106, %s107
      %p111 = pneg %p105
      %p112 = scmp.eq.s32.totalorder %s12, 1
      %p113 = por %p111, %p112
      %p114 = scmp.ne.s32.totalorder %s106, %s109
      %p115 = scmp.eq.s32.totalorder %s12, 0
      %p116 = por %p114, %p115
      %p117 = scmp.ne.s32.totalorder %s106, %s109
      %p118 = scmp.eq.s32.totalorder %s17, 1
      %p119 = por %p117, %p118
      %p120 = scmp.ne.s32.totalorder %s109, %s110
      %p121 = scmp.eq.s32.totalorder %s17, 0
      %p122 = por %p120, %p121
      %p123 = scmp.ne.s32.totalorder %s109, %s110
      %p124 = scmp.eq.s32.totalorder %s18, 1
      %p125 = por %p123, %p124
      %p127 = scmp.ne.s32.totalorder %s110, %s126
      %p128 = scmp.eq.s32.totalorder %s18, 0
      %p129 = por %p127, %p128
      %p130 = scmp.le.s32.totalorder 1, %s12
      %p131 = scmp.lt.s32.totalorder %s12, 3
      %p132 = pnand %p130, %p131
      %p133 = pneg %p132
      // Predicated region
      $region9: #{tpu_custom_call.1} parent=5 // pred_check
        _
      $region10: #{tpu_custom_call.1} parent=5 // pred_check_branch
        %135 = sbr.rel (%p132) target = $region12
      $region11: #{tpu_custom_call.1} parent=5 // pred_region
        %s136 = ssub.s32 %s12, 1
        // Predicated region
        $region13: #{tpu_custom_call.1} parent=11 // pred_check
          %p137 = pneg %p73
        $region14: #{tpu_custom_call.1} parent=11 // pred_check_branch
          %139 = sbr.rel (%p137) target = $region16
        $region15: #{tpu_custom_call.1} parent=11 // pred_region
          _
        $region16: #{tpu_custom_call.1} parent=11 // pred_fallthru
          _
        // Predicated region
        $region17: #{tpu_custom_call.1} parent=11 // pred_check
          %p140 = pneg %p94
        $region18: #{tpu_custom_call.1} parent=11 // pred_check_branch
          %142 = sbr.rel (%p140) target = $region20
        $region19: #{tpu_custom_call.1} parent=11 // pred_region
          _
        $region20: #{tpu_custom_call.1} parent=11 // pred_fallthru
          _
      $region12: #{tpu_custom_call.1} parent=5 // pred_fallthru
        _
      %p143 = scmp.lt.s32.totalorder %s12, 2
      // Predicated region
      $region21: #{tpu_custom_call.1} parent=5 // pred_check
        %p144 = pneg %p143
      $region22: #{tpu_custom_call.1} parent=5 // pred_check_branch
        %146 = sbr.rel (%p144) target = $region24
      $region23: #{tpu_custom_call.1} parent=5 // pred_region
        // Predicated region
        $region25: #{tpu_custom_call.1} parent=23 // pred_check
          %p147 = pneg %p46
        $region26: #{tpu_custom_call.1} parent=23 // pred_check_branch
          %149 = sbr.rel (%p147) target = $region28
        $region27: #{tpu_custom_call.1} parent=23 // pred_region
          %s150 = smul.u32 6, %s20
          %p151 = scmp.lt.s32.totalorder %s19, 1
          %s152 = scalar_select %p151, %s19, 1
          %p153 = scmp.lt.s32.totalorder %s150, 5
          %s154 = scalar_select %p153, %s150, 5
          %s155 = smul.addr %s152, 6
          %s156 = sadd.s32 %s154, %s155
          %s157 = smul.addr %s156, 8
          %s158 = scalar_lea.vmem %s0, %s157
          %s159 = smul.u32 6, %s20
        $region28: #{tpu_custom_call.1} parent=23 // pred_fallthru
          _
      $region24: #{tpu_custom_call.1} parent=5 // pred_fallthru
        _
      %p160 = scmp.le.s32.totalorder 1, %s12
      %p161 = scmp.lt.s32.totalorder %s12, 3
      %p162 = pnand %p160, %p161
      %p163 = pneg %p162
      // Predicated region
      $region29: #{tpu_custom_call.1} parent=5 // pred_check
        _
      $region30: #{tpu_custom_call.1} parent=5 // pred_check_branch
        %165 = sbr.rel (%p162) target = $region32
      $region31: #{tpu_custom_call.1} parent=5 // pred_region
        %s166 = ssub.s32 %s12, 1
        %s167 = smul.u32 6, %s22
        %p168 = scmp.lt.s32.totalorder %s21, 1
        %s169 = scalar_select %p168, %s21, 1
        %p170 = scmp.lt.s32.totalorder %s167, 5
        %s171 = scalar_select %p170, %s167, 5
        %s172 = smul.addr %s169, 6
        %s173 = sadd.s32 %s171, %s172
        %s174 = smul.addr %s173, 8
        %s175 = scalar_lea.vmem %s0, %s174
        %p176 = pneg %p52
        %p177 = pneg %p49
        %p178 = pneg %p73
        %p179 = pneg %p70
        %p180 = pneg %p94
        %p181 = pneg %p91
        %p182 = pneg %p122
        %p183 = pneg %p119
        %s184 = sand.u32 %s109, 1
        %s185 = scalar_lea.sflag [#allocation3], %s184
        %s186 = sand.u32 %s109, 1
        %s187 = smul.addr %s186, 48
        %s188 = scalar_lea.vmem [#allocation2], %s187
        %s189 = smul.u32 6, %s22
        %p190 = scmp.lt.s32.totalorder %s21, 1
        %s191 = scalar_select %p190, %s21, 1
        %p192 = scmp.lt.s32.totalorder %s189, 5
        %s193 = scalar_select %p192, %s189, 5
        %s194 = smul.addr %s191, 6
        %s195 = sadd.s32 %s193, %s194
        %s196 = smul.addr %s195, 8
        %s197 = scalar_lea.vmem %s0, %s196
        %s198 = smul.u32 6, %s22
        %s199 = smul.u32 6, %s22
        %v201 = vld [vmem:[%s1] sm:$0xf]
        %v202 = vld [vmem:[%s1 + $0x4] sm:$0xf]
        %v203 = vld [vmem:[%s1 + $0x10] sm:$0xf]
        %v204 = vld [vmem:[%s1 + $0x14] sm:$0xf]
        %v205 = vld [vmem:[%s1 + $0x20] sm:$0xf]
        %v206 = vld [vmem:[%s1 + $0x24] sm:$0xf]
        %v207 = vld [vmem:[%s1 + $0x30] sm:$0xf]
        %v208 = vld [vmem:[%s1 + $0x34] sm:$0xf]
        %v209 = vld [vmem:[%s1 + $0x38] sm:$0xf]
        %v210 = vld [vmem:[%s1 + $0x3c] sm:$0xf]
        %v211 = vld [vmem:[%s1 + $0x40] sm:$0xf]
        %v212 = vld [vmem:[%s1 + $0x44] sm:$0xf]
        %v213 = vld [vmem:[%s1 + $0x48] sm:$0xf]
        %v214 = vld [vmem:[%s1 + $0x4c] sm:$0xf]
        %v215 = vld [vmem:[%s1 + $0x50] sm:$0xf]
        %v216 = vld [vmem:[%s1 + $0x54] sm:$0xf]
        %v217 = vld [vmem:[%s1 + $0x58] sm:$0xf]
        %v218 = vld [vmem:[%s1 + $0x5c] sm:$0xf]
        %v219 = vld [vmem:[%s1 + $0x60] sm:$0xf]
        %v220 = vld [vmem:[%s2] sm:$0xff]
        %v221 = vld [vmem:[%s2 + $0x8] sm:$0xff]
        %v222 = vld [vmem:[%s2 + $0x20] sm:$0xff]
        %v223 = vld [vmem:[%s2 + $0x28] sm:$0xff]
        %v224 = vld [vmem:[%s2 + $0x40] sm:$0xff]
        %v225 = vld [vmem:[%s2 + $0x48] sm:$0xff]
        %v226 = vld [vmem:[%s2 + $0x60] sm:$0xff]
        %v227 = vld [vmem:[%s2 + $0x68] sm:$0xff]
        %v228 = vld [vmem:[%s2 + $0x70] sm:$0xff]
        %v229 = vld [vmem:[%s2 + $0x78] sm:$0xff]
        %v230 = vld [vmem:[%s2 + $0x80] sm:$0xff]
        %v231 = vld [vmem:[%s2 + $0x88] sm:$0xff]
        %v232 = vld [vmem:[%s2 + $0x90] sm:$0xff]
        %v233 = vld [vmem:[%s2 + $0x98] sm:$0xff]
        %v234 = vld [vmem:[%s2 + $0xa0] sm:$0xff]
        %v235 = vld [vmem:[%s2 + $0xa8] sm:$0xff]
        %v236 = vld [vmem:[%s2 + $0xb0] sm:$0xff]
        %v237 = vld [vmem:[%s2 + $0xb8] sm:$0xff]
        %v238 = vld [vmem:[%s2 + $0xc0] sm:$0xff]
        %v239 = vld [vmem:[%s197] sm:$0x3f]
        %v240 = vld [vmem:[%s197 + $0x8] sm:$0x3f]
        %v241 = vld [vmem:[%s197 + $0x10] sm:$0x3f]
        %v242 = vld [vmem:[%s197 + $0x18] sm:$0x3f]
        %v243 = vld [vmem:[%s197 + $0x20] sm:$0x3f]
        %v244 = vld [vmem:[%s197 + $0x28] sm:$0x3f]
        %v245 = vpack.c.bf16 %v239, %v239
        %v246 = vpack.c.bf16 %v240, %v240
        %v247 = vpack.c.bf16 %v241, %v241
        %v248 = vpack.c.bf16 %v242, %v242
        %v249 = vpack.c.bf16 %v243, %v243
        %v250 = vpack.c.bf16 %v244, %v244
        %252 = vset.pattern.permute.xlu0 0
        %253 = vperm.xlu0 %252, %v220
        %v254 = vpop.permute.xlu0 %253
        %257 = vset.pattern.permute.xlu0 0
        %258 = vperm.xlu0 %257, %v221
        %v259 = vpop.permute.xlu0 %258
        %v263 = vunpack.c.l.b16 %v201
        %v264 = vunpack.c.l.b16 %v202
        %v265 = vpack.c.b16 %v264, %v263
        %vm266 = vcmask 48128
        %v268 = vsel %vm266, %v265, 0
        %vm270 = vcmask 1042432
        %v272 = vsel %vm270, %v245, 0
        %v275 = vsel %vm270, %v246, 0
        %v278 = vsel %vm270, %v247, 0
        %v281 = vsel %vm270, %v248, 0
        %v284 = vsel %vm270, %v249, 0
        %v287 = vsel %vm270, %v250, 0
        %289 = vmatpush.bf16.msra.mxu0 0
        %290 = vmatpush.bf16.msra.mxu0 0
        %291 = vmatpush.bf16.msra.mxu0 0
        %292 = vmatpush.bf16.msra.mxu0 0
        %293 = vmatpush.bf16.msra.mxu0 0
        %294 = vmatpush.bf16.msra.mxu0 0
        %295 = vmatpush.bf16.msra.mxu0 0
        %296 = vmatpush.bf16.msra.mxu0 %v272
        %297 = vmatmul.bf16.gmra.mxu0 %v268
        %v298 = vpop.f32.mrf.mxu0
        %v299 = vadd.f32 %v254, %v298
        %v300 = vpop.f32.mrf.mxu0
        %v301 = vadd.f32 %v259, %v300
        %302 = vdwg.mxu0
        %303 = vmatpush.bf16.msra.mxu0 0
        %304 = vmatpush.bf16.msra.mxu0 0
        %305 = vmatpush.bf16.msra.mxu0 0
        %306 = vmatpush.bf16.msra.mxu0 0
        %307 = vmatpush.bf16.msra.mxu0 0
        %308 = vmatpush.bf16.msra.mxu0 0
        %309 = vmatpush.bf16.msra.mxu0 0
        %310 = vmatpush.bf16.msra.mxu0 %v275
        %311 = vmatmul.bf16.gmra.mxu0 %v268
        %v312 = vpop.f32.mrf.mxu0
        %v313 = vadd.f32 %v254, %v312
        %v314 = vpop.f32.mrf.mxu0
        %v315 = vadd.f32 %v259, %v314
        %316 = vdwg.mxu0
        %317 = vmatpush.bf16.msra.mxu0 0
        %318 = vmatpush.bf16.msra.mxu0 0
        %319 = vmatpush.bf16.msra.mxu0 0
        %320 = vmatpush.bf16.msra.mxu0 0
        %321 = vmatpush.bf16.msra.mxu0 0
        %322 = vmatpush.bf16.msra.mxu0 0
        %323 = vmatpush.bf16.msra.mxu0 0
        %324 = vmatpush.bf16.msra.mxu0 %v278
        %325 = vmatmul.bf16.gmra.mxu0 %v268
        %v326 = vpop.f32.mrf.mxu0
        %v327 = vadd.f32 %v254, %v326
        %v328 = vpop.f32.mrf.mxu0
        %v329 = vadd.f32 %v259, %v328
        %330 = vdwg.mxu0
        %331 = vmatpush.bf16.msra.mxu0 0
        %332 = vmatpush.bf16.msra.mxu0 0
        %333 = vmatpush.bf16.msra.mxu0 0
        %334 = vmatpush.bf16.msra.mxu0 0
        %335 = vmatpush.bf16.msra.mxu0 0
        %336 = vmatpush.bf16.msra.mxu0 0
        %337 = vmatpush.bf16.msra.mxu0 0
        %338 = vmatpush.bf16.msra.mxu0 %v281
        %339 = vmatmul.bf16.gmra.mxu0 %v268
        %v340 = vpop.f32.mrf.mxu0
        %v341 = vadd.f32 %v254, %v340
        %v342 = vpop.f32.mrf.mxu0
        %v343 = vadd.f32 %v259, %v342
        %344 = vdwg.mxu0
        %345 = vmatpush.bf16.msra.mxu0 0
        %346 = vmatpush.bf16.msra.mxu0 0
        %347 = vmatpush.bf16.msra.mxu0 0
        %348 = vmatpush.bf16.msra.mxu0 0
        %349 = vmatpush.bf16.msra.mxu0 0
        %350 = vmatpush.bf16.msra.mxu0 0
        %351 = vmatpush.bf16.msra.mxu0 0
        %352 = vmatpush.bf16.msra.mxu0 %v284
        %353 = vmatmul.bf16.gmra.mxu0 %v268
        %v354 = vpop.f32.mrf.mxu0
        %v355 = vadd.f32 %v254, %v354
        %v356 = vpop.f32.mrf.mxu0
        %v357 = vadd.f32 %v259, %v356
        %358 = vdwg.mxu0
        %359 = vmatpush.bf16.msra.mxu0 0
        %360 = vmatpush.bf16.msra.mxu0 0
        %361 = vmatpush.bf16.msra.mxu0 0
        %362 = vmatpush.bf16.msra.mxu0 0
        %363 = vmatpush.bf16.msra.mxu0 0
        %364 = vmatpush.bf16.msra.mxu0 0
        %365 = vmatpush.bf16.msra.mxu0 0
        %366 = vmatpush.bf16.msra.mxu0 %v287
        %367 = vmatmul.bf16.gmra.mxu0 %v268
        %v368 = vpop.f32.mrf.mxu0
        %v369 = vadd.f32 %v254, %v368
        %v370 = vpop.f32.mrf.mxu0
        %v371 = vadd.f32 %v259, %v370
        %372 = vdwg.mxu0
        %v373 = vmax.f32 %v299, 0.0
        %v374 = vmax.f32 %v313, 0.0
        %v375 = vmax.f32 %v327, 0.0
        %v376 = vmax.f32 %v341, 0.0
        %v377 = vmax.f32 %v355, 0.0
        %v378 = vmax.f32 %v369, 0.0
        %v379 = vmax.f32 %v301, 0.0
        %v380 = vmax.f32 %v315, 0.0
        %v381 = vmax.f32 %v329, 0.0
        %v382 = vmax.f32 %v343, 0.0
        %v383 = vmax.f32 %v357, 0.0
        %v384 = vmax.f32 %v371, 0.0
        %v385 = vpack.c.bf16 %v374, %v373
        %v386 = vpack.c.bf16 %v376, %v375
        %v387 = vpack.c.bf16 %v378, %v377
        %v388 = vpack.c.bf16 %v380, %v379
        %v389 = vpack.c.bf16 %v382, %v381
        %v390 = vpack.c.bf16 %v384, %v383
        %392 = vset.pattern.permute.xlu0 0
        %393 = vperm.xlu0 %392, %v222
        %v394 = vpop.permute.xlu0 %393
        %397 = vset.pattern.permute.xlu0 0
        %398 = vperm.xlu0 %397, %v223
        %v399 = vpop.permute.xlu0 %398
        %v403 = vunpack.c.l.b16 %v203
        %v404 = vunpack.c.l.b16 %v204
        %v405 = vpack.c.b16 %v404, %v403
        %v412 = vunpack.c.l.b16 %v385
        %v413 = vunpack.c.h.b16 %v385
        %v414 = vunpack.c.l.b16 %v386
        %v415 = vunpack.c.h.b16 %v386
        %v416 = vunpack.c.l.b16 %v387
        %v417 = vunpack.c.h.b16 %v387
        %v418 = vunpack.c.l.b16 %v388
        %v419 = vunpack.c.h.b16 %v388
        %v420 = vunpack.c.l.b16 %v389
        %v421 = vunpack.c.h.b16 %v389
        %v422 = vunpack.c.l.b16 %v390
        %v423 = vunpack.c.h.b16 %v390
        %v424 = vpack.c.b16 %v418, %v412
        %v425 = vpack.c.b16 %v419, %v413
        %v426 = vpack.c.b16 %v420, %v414
        %v427 = vpack.c.b16 %v421, %v415
        %v428 = vpack.c.b16 %v422, %v416
        %v429 = vpack.c.b16 %v423, %v417
        %vm436 = vcmask 130048
        %v438 = vsel %vm436, %v405, 0
        %440 = vmatpush.bf16.msra.mxu0 0
        %441 = vmatpush.bf16.msra.mxu0 0
        %442 = vmatpush.bf16.msra.mxu0 0
        %443 = vmatpush.bf16.msra.mxu0 0
        %444 = vmatpush.bf16.msra.mxu0 0
        %445 = vmatpush.bf16.msra.mxu0 0
        %446 = vmatpush.bf16.msra.mxu0 0
        %447 = vmatpush.bf16.msra.mxu0 %v424
        %448 = vmatmul.bf16.gmra.mxu0 %v438
        %v449 = vpop.f32.mrf.mxu0
        %v450 = vadd.f32 %v394, %v449
        %v451 = vpop.f32.mrf.mxu0
        %v452 = vadd.f32 %v399, %v451
        %453 = vdwg.mxu0
        %454 = vmatpush.bf16.msra.mxu0 0
        %455 = vmatpush.bf16.msra.mxu0 0
        %456 = vmatpush.bf16.msra.mxu0 0
        %457 = vmatpush.bf16.msra.mxu0 0
        %458 = vmatpush.bf16.msra.mxu0 0
        %459 = vmatpush.bf16.msra.mxu0 0
        %460 = vmatpush.bf16.msra.mxu0 0
        %461 = vmatpush.bf16.msra.mxu0 %v425
        %462 = vmatmul.bf16.gmra.mxu0 %v438
        %v463 = vpop.f32.mrf.mxu0
        %v464 = vadd.f32 %v394, %v463
        %v465 = vpop.f32.mrf.mxu0
        %v466 = vadd.f32 %v399, %v465
        %467 = vdwg.mxu0
        %468 = vmatpush.bf16.msra.mxu0 0
        %469 = vmatpush.bf16.msra.mxu0 0
        %470 = vmatpush.bf16.msra.mxu0 0
        %471 = vmatpush.bf16.msra.mxu0 0
        %472 = vmatpush.bf16.msra.mxu0 0
        %473 = vmatpush.bf16.msra.mxu0 0
        %474 = vmatpush.bf16.msra.mxu0 0
        %475 = vmatpush.bf16.msra.mxu0 %v426
        %476 = vmatmul.bf16.gmra.mxu0 %v438
        %v477 = vpop.f32.mrf.mxu0
        %v478 = vadd.f32 %v394, %v477
        %v479 = vpop.f32.mrf.mxu0
        %v480 = vadd.f32 %v399, %v479
        %481 = vdwg.mxu0
        %482 = vmatpush.bf16.msra.mxu0 0
        %483 = vmatpush.bf16.msra.mxu0 0
        %484 = vmatpush.bf16.msra.mxu0 0
        %485 = vmatpush.bf16.msra.mxu0 0
        %486 = vmatpush.bf16.msra.mxu0 0
        %487 = vmatpush.bf16.msra.mxu0 0
        %488 = vmatpush.bf16.msra.mxu0 0
        %489 = vmatpush.bf16.msra.mxu0 %v427
        %490 = vmatmul.bf16.gmra.mxu0 %v438
        %v491 = vpop.f32.mrf.mxu0
        %v492 = vadd.f32 %v394, %v491
        %v493 = vpop.f32.mrf.mxu0
        %v494 = vadd.f32 %v399, %v493
        %495 = vdwg.mxu0
        %496 = vmatpush.bf16.msra.mxu0 0
        %497 = vmatpush.bf16.msra.mxu0 0
        %498 = vmatpush.bf16.msra.mxu0 0
        %499 = vmatpush.bf16.msra.mxu0 0
        %500 = vmatpush.bf16.msra.mxu0 0
        %501 = vmatpush.bf16.msra.mxu0 0
        %502 = vmatpush.bf16.msra.mxu0 0
        %503 = vmatpush.bf16.msra.mxu0 %v428
        %504 = vmatmul.bf16.gmra.mxu0 %v438
        %v505 = vpop.f32.mrf.mxu0
        %v506 = vadd.f32 %v394, %v505
        %v507 = vpop.f32.mrf.mxu0
        %v508 = vadd.f32 %v399, %v507
        %509 = vdwg.mxu0
        %510 = vmatpush.bf16.msra.mxu0 0
        %511 = vmatpush.bf16.msra.mxu0 0
        %512 = vmatpush.bf16.msra.mxu0 0
        %513 = vmatpush.bf16.msra.mxu0 0
        %514 = vmatpush.bf16.msra.mxu0 0
        %515 = vmatpush.bf16.msra.mxu0 0
        %516 = vmatpush.bf16.msra.mxu0 0
        %517 = vmatpush.bf16.msra.mxu0 %v429
        %518 = vmatmul.bf16.gmra.mxu0 %v438
        %v519 = vpop.f32.mrf.mxu0
        %v520 = vadd.f32 %v394, %v519
        %v521 = vpop.f32.mrf.mxu0
        %v522 = vadd.f32 %v399, %v521
        %523 = vdwg.mxu0
        %v524 = vmax.f32 %v450, 0.0
        %v525 = vmax.f32 %v464, 0.0
        %v526 = vmax.f32 %v478, 0.0
        %v527 = vmax.f32 %v492, 0.0
        %v528 = vmax.f32 %v506, 0.0
        %v529 = vmax.f32 %v520, 0.0
        %v530 = vmax.f32 %v452, 0.0
        %v531 = vmax.f32 %v466, 0.0
        %v532 = vmax.f32 %v480, 0.0
        %v533 = vmax.f32 %v494, 0.0
        %v534 = vmax.f32 %v508, 0.0
        %v535 = vmax.f32 %v522, 0.0
        %v536 = vpack.c.bf16 %v530, %v524
        %v537 = vpack.c.bf16 %v531, %v525
        %v538 = vpack.c.bf16 %v532, %v526
        %v539 = vpack.c.bf16 %v533, %v527
        %v540 = vpack.c.bf16 %v534, %v528
        %v541 = vpack.c.bf16 %v535, %v529
        %543 = vset.pattern.permute.xlu0 0
        %544 = vperm.xlu0 %543, %v224
        %v545 = vpop.permute.xlu0 %544
        %548 = vset.pattern.permute.xlu0 0
        %549 = vperm.xlu0 %548, %v225
        %v550 = vpop.permute.xlu0 %549
        %v554 = vunpack.c.l.b16 %v205
        %v555 = vunpack.c.l.b16 %v206
        %v556 = vpack.c.b16 %v555, %v554
        %v558 = vsel %vm436, %v556, 0
        %560 = vmatpush.bf16.msra.mxu0 0
        %561 = vmatpush.bf16.msra.mxu0 0
        %562 = vmatpush.bf16.msra.mxu0 0
        %563 = vmatpush.bf16.msra.mxu0 0
        %564 = vmatpush.bf16.msra.mxu0 0
        %565 = vmatpush.bf16.msra.mxu0 0
        %566 = vmatpush.bf16.msra.mxu0 0
        %567 = vmatpush.bf16.msra.mxu0 %v536
        %568 = vmatmul.bf16.gmra.mxu0 %v558
        %v569 = vpop.f32.mrf.mxu0
        %v570 = vadd.f32 %v545, %v569
        %v571 = vpop.f32.mrf.mxu0
        %v572 = vadd.f32 %v550, %v571
        %573 = vdwg.mxu0
        %574 = vmatpush.bf16.msra.mxu0 0
        %575 = vmatpush.bf16.msra.mxu0 0
        %576 = vmatpush.bf16.msra.mxu0 0
        %577 = vmatpush.bf16.msra.mxu0 0
        %578 = vmatpush.bf16.msra.mxu0 0
        %579 = vmatpush.bf16.msra.mxu0 0
        %580 = vmatpush.bf16.msra.mxu0 0
        %581 = vmatpush.bf16.msra.mxu0 %v537
        %582 = vmatmul.bf16.gmra.mxu0 %v558
        %v583 = vpop.f32.mrf.mxu0
        %v584 = vadd.f32 %v545, %v583
        %v585 = vpop.f32.mrf.mxu0
        %v586 = vadd.f32 %v550, %v585
        %587 = vdwg.mxu0
        %588 = vmatpush.bf16.msra.mxu0 0
        %589 = vmatpush.bf16.msra.mxu0 0
        %590 = vmatpush.bf16.msra.mxu0 0
        %591 = vmatpush.bf16.msra.mxu0 0
        %592 = vmatpush.bf16.msra.mxu0 0
        %593 = vmatpush.bf16.msra.mxu0 0
        %594 = vmatpush.bf16.msra.mxu0 0
        %595 = vmatpush.bf16.msra.mxu0 %v538
        %596 = vmatmul.bf16.gmra.mxu0 %v558
        %v597 = vpop.f32.mrf.mxu0
        %v598 = vadd.f32 %v545, %v597
        %v599 = vpop.f32.mrf.mxu0
        %v600 = vadd.f32 %v550, %v599
        %601 = vdwg.mxu0
        %602 = vmatpush.bf16.msra.mxu0 0
        %603 = vmatpush.bf16.msra.mxu0 0
        %604 = vmatpush.bf16.msra.mxu0 0
        %605 = vmatpush.bf16.msra.mxu0 0
        %606 = vmatpush.bf16.msra.mxu0 0
        %607 = vmatpush.bf16.msra.mxu0 0
        %608 = vmatpush.bf16.msra.mxu0 0
        %609 = vmatpush.bf16.msra.mxu0 %v539
        %610 = vmatmul.bf16.gmra.mxu0 %v558
        %v611 = vpop.f32.mrf.mxu0
        %v612 = vadd.f32 %v545, %v611
        %v613 = vpop.f32.mrf.mxu0
        %v614 = vadd.f32 %v550, %v613
        %615 = vdwg.mxu0
        %616 = vmatpush.bf16.msra.mxu0 0
        %617 = vmatpush.bf16.msra.mxu0 0
        %618 = vmatpush.bf16.msra.mxu0 0
        %619 = vmatpush.bf16.msra.mxu0 0
        %620 = vmatpush.bf16.msra.mxu0 0
        %621 = vmatpush.bf16.msra.mxu0 0
        %622 = vmatpush.bf16.msra.mxu0 0
        %623 = vmatpush.bf16.msra.mxu0 %v540
        %624 = vmatmul.bf16.gmra.mxu0 %v558
        %v625 = vpop.f32.mrf.mxu0
        %v626 = vadd.f32 %v545, %v625
        %v627 = vpop.f32.mrf.mxu0
        %v628 = vadd.f32 %v550, %v627
        %629 = vdwg.mxu0
        %630 = vmatpush.bf16.msra.mxu0 0
        %631 = vmatpush.bf16.msra.mxu0 0
        %632 = vmatpush.bf16.msra.mxu0 0
        %633 = vmatpush.bf16.msra.mxu0 0
        %634 = vmatpush.bf16.msra.mxu0 0
        %635 = vmatpush.bf16.msra.mxu0 0
        %636 = vmatpush.bf16.msra.mxu0 0
        %637 = vmatpush.bf16.msra.mxu0 %v541
        %638 = vmatmul.bf16.gmra.mxu0 %v558
        %v639 = vpop.f32.mrf.mxu0
        %v640 = vadd.f32 %v545, %v639
        %v641 = vpop.f32.mrf.mxu0
        %v642 = vadd.f32 %v550, %v641
        %643 = vdwg.mxu0
        %v644 = vunpack.c.l.bf16 %v385
        %v645 = vunpack.c.h.bf16 %v385
        %v646 = vunpack.c.l.bf16 %v386
        %v647 = vunpack.c.h.bf16 %v386
        %v648 = vunpack.c.l.bf16 %v387
        %v649 = vunpack.c.h.bf16 %v387
        %v650 = vunpack.c.l.bf16 %v388
        %v651 = vunpack.c.h.bf16 %v388
        %v652 = vunpack.c.l.bf16 %v389
        %v653 = vunpack.c.h.bf16 %v389
        %v654 = vunpack.c.l.bf16 %v390
        %v655 = vunpack.c.h.bf16 %v390
        %v656 = vadd.f32 %v644, %v570
        %v657 = vadd.f32 %v645, %v584
        %v658 = vadd.f32 %v646, %v598
        %v659 = vadd.f32 %v647, %v612
        %v660 = vadd.f32 %v648, %v626
        %v661 = vadd.f32 %v649, %v640
        %v662 = vadd.f32 %v650, %v572
        %v663 = vadd.f32 %v651, %v586
        %v664 = vadd.f32 %v652, %v600
        %v665 = vadd.f32 %v653, %v614
        %v666 = vadd.f32 %v654, %v628
        %v667 = vadd.f32 %v655, %v642
        %v668 = vmax.f32 %v656, 0.0
        %v669 = vmax.f32 %v657, 0.0
        %v670 = vmax.f32 %v658, 0.0
        %v671 = vmax.f32 %v659, 0.0
        %v672 = vmax.f32 %v660, 0.0
        %v673 = vmax.f32 %v661, 0.0
        %v674 = vmax.f32 %v662, 0.0
        %v675 = vmax.f32 %v663, 0.0
        %v676 = vmax.f32 %v664, 0.0
        %v677 = vmax.f32 %v665, 0.0
        %v678 = vmax.f32 %v666, 0.0
        %v679 = vmax.f32 %v667, 0.0
        %v680 = vpack.c.bf16 %v674, %v668
        %v681 = vpack.c.bf16 %v675, %v669
        %v682 = vpack.c.bf16 %v676, %v670
        %v683 = vpack.c.bf16 %v677, %v671
        %v684 = vpack.c.bf16 %v678, %v672
        %v685 = vpack.c.bf16 %v679, %v673
        %687 = vset.pattern.permute.xlu0 0
        %688 = vperm.xlu0 %687, %v226
        %v689 = vpop.permute.xlu0 %688
        %692 = vset.pattern.permute.xlu0 0
        %693 = vperm.xlu0 %692, %v227
        %v694 = vpop.permute.xlu0 %693
        %697 = vset.pattern.permute.xlu0 0
        %698 = vperm.xlu0 %697, %v228
        %v699 = vpop.permute.xlu0 %698
        %702 = vset.pattern.permute.xlu0 0
        %703 = vperm.xlu0 %702, %v229
        %v704 = vpop.permute.xlu0 %703
        %v710 = vunpack.c.l.b16 %v207
        %v711 = vunpack.c.l.b16 %v208
        %v712 = vunpack.c.l.b16 %v209
        %v713 = vunpack.c.l.b16 %v210
        %v714 = vpack.c.b16 %v711, %v710
        %v715 = vpack.c.b16 %v713, %v712
        %v717 = vsel %vm436, %v714, 0
        %v720 = vsel %vm436, %v715, 0
        %722 = vmatpush.bf16.msra.mxu0 0
        %723 = vmatpush.bf16.msra.mxu0 0
        %724 = vmatpush.bf16.msra.mxu0 0
        %725 = vmatpush.bf16.msra.mxu0 0
        %726 = vmatpush.bf16.msra.mxu0 0
        %727 = vmatpush.bf16.msra.mxu0 0
        %728 = vmatpush.bf16.msra.mxu0 0
        %729 = vmatpush.bf16.msra.mxu0 %v680
        %730 = vmatmul.bf16.gmra.mxu0 %v717
        %v731 = vpop.f32.mrf.mxu0
        %v732 = vadd.f32 %v689, %v731
        %v733 = vpop.f32.mrf.mxu0
        %v734 = vadd.f32 %v694, %v733
        %735 = vmatmul.bf16.gmra.mxu0 %v720
        %v736 = vpop.f32.mrf.mxu0
        %v737 = vadd.f32 %v699, %v736
        %v738 = vpop.f32.mrf.mxu0
        %v739 = vadd.f32 %v704, %v738
        %740 = vdwg.mxu0
        %741 = vmatpush.bf16.msra.mxu0 0
        %742 = vmatpush.bf16.msra.mxu0 0
        %743 = vmatpush.bf16.msra.mxu0 0
        %744 = vmatpush.bf16.msra.mxu0 0
        %745 = vmatpush.bf16.msra.mxu0 0
        %746 = vmatpush.bf16.msra.mxu0 0
        %747 = vmatpush.bf16.msra.mxu0 0
        %748 = vmatpush.bf16.msra.mxu0 %v681
        %749 = vmatmul.bf16.gmra.mxu0 %v717
        %v750 = vpop.f32.mrf.mxu0
        %v751 = vadd.f32 %v689, %v750
        %v752 = vpop.f32.mrf.mxu0
        %v753 = vadd.f32 %v694, %v752
        %754 = vmatmul.bf16.gmra.mxu0 %v720
        %v755 = vpop.f32.mrf.mxu0
        %v756 = vadd.f32 %v699, %v755
        %v757 = vpop.f32.mrf.mxu0
        %v758 = vadd.f32 %v704, %v757
        %759 = vdwg.mxu0
        %760 = vmatpush.bf16.msra.mxu0 0
        %761 = vmatpush.bf16.msra.mxu0 0
        %762 = vmatpush.bf16.msra.mxu0 0
        %763 = vmatpush.bf16.msra.mxu0 0
        %764 = vmatpush.bf16.msra.mxu0 0
        %765 = vmatpush.bf16.msra.mxu0 0
        %766 = vmatpush.bf16.msra.mxu0 0
        %767 = vmatpush.bf16.msra.mxu0 %v682
        %768 = vmatmul.bf16.gmra.mxu0 %v717
        %v769 = vpop.f32.mrf.mxu0
        %v770 = vadd.f32 %v689, %v769
        %v771 = vpop.f32.mrf.mxu0
        %v772 = vadd.f32 %v694, %v771
        %773 = vmatmul.bf16.gmra.mxu0 %v720
        %v774 = vpop.f32.mrf.mxu0
        %v775 = vadd.f32 %v699, %v774
        %v776 = vpop.f32.mrf.mxu0
        %v777 = vadd.f32 %v704, %v776
        %778 = vdwg.mxu0
        %779 = vmatpush.bf16.msra.mxu0 0
        %780 = vmatpush.bf16.msra.mxu0 0
        %781 = vmatpush.bf16.msra.mxu0 0
        %782 = vmatpush.bf16.msra.mxu0 0
        %783 = vmatpush.bf16.msra.mxu0 0
        %784 = vmatpush.bf16.msra.mxu0 0
        %785 = vmatpush.bf16.msra.mxu0 0
        %786 = vmatpush.bf16.msra.mxu0 %v683
        %787 = vmatmul.bf16.gmra.mxu0 %v717
        %v788 = vpop.f32.mrf.mxu0
        %v789 = vadd.f32 %v689, %v788
        %v790 = vpop.f32.mrf.mxu0
        %v791 = vadd.f32 %v694, %v790
        %792 = vmatmul.bf16.gmra.mxu0 %v720
        %v793 = vpop.f32.mrf.mxu0
        %v794 = vadd.f32 %v699, %v793
        %v795 = vpop.f32.mrf.mxu0
        %v796 = vadd.f32 %v704, %v795
        %797 = vdwg.mxu0
        %798 = vmatpush.bf16.msra.mxu0 0
        %799 = vmatpush.bf16.msra.mxu0 0
        %800 = vmatpush.bf16.msra.mxu0 0
        %801 = vmatpush.bf16.msra.mxu0 0
        %802 = vmatpush.bf16.msra.mxu0 0
        %803 = vmatpush.bf16.msra.mxu0 0
        %804 = vmatpush.bf16.msra.mxu0 0
        %805 = vmatpush.bf16.msra.mxu0 %v684
        %806 = vmatmul.bf16.gmra.mxu0 %v717
        %v807 = vpop.f32.mrf.mxu0
        %v808 = vadd.f32 %v689, %v807
        %v809 = vpop.f32.mrf.mxu0
        %v810 = vadd.f32 %v694, %v809
        %811 = vmatmul.bf16.gmra.mxu0 %v720
        %v812 = vpop.f32.mrf.mxu0
        %v813 = vadd.f32 %v699, %v812
        %v814 = vpop.f32.mrf.mxu0
        %v815 = vadd.f32 %v704, %v814
        %816 = vdwg.mxu0
        %817 = vmatpush.bf16.msra.mxu0 0
        %818 = vmatpush.bf16.msra.mxu0 0
        %819 = vmatpush.bf16.msra.mxu0 0
        %820 = vmatpush.bf16.msra.mxu0 0
        %821 = vmatpush.bf16.msra.mxu0 0
        %822 = vmatpush.bf16.msra.mxu0 0
        %823 = vmatpush.bf16.msra.mxu0 0
        %824 = vmatpush.bf16.msra.mxu0 %v685
        %825 = vmatmul.bf16.gmra.mxu0 %v717
        %v826 = vpop.f32.mrf.mxu0
        %v827 = vadd.f32 %v689, %v826
        %v828 = vpop.f32.mrf.mxu0
        %v829 = vadd.f32 %v694, %v828
        %830 = vmatmul.bf16.gmra.mxu0 %v720
        %v831 = vpop.f32.mrf.mxu0
        %v832 = vadd.f32 %v699, %v831
        %v833 = vpop.f32.mrf.mxu0
        %v834 = vadd.f32 %v704, %v833
        %835 = vdwg.mxu0
        %v836 = vmax.f32 %v732, 0.0
        %v837 = vmax.f32 %v751, 0.0
        %v838 = vmax.f32 %v770, 0.0
        %v839 = vmax.f32 %v789, 0.0
        %v840 = vmax.f32 %v808, 0.0
        %v841 = vmax.f32 %v827, 0.0
        %v842 = vmax.f32 %v734, 0.0
        %v843 = vmax.f32 %v753, 0.0
        %v844 = vmax.f32 %v772, 0.0
        %v845 = vmax.f32 %v791, 0.0
        %v846 = vmax.f32 %v810, 0.0
        %v847 = vmax.f32 %v829, 0.0
        %v848 = vmax.f32 %v737, 0.0
        %v849 = vmax.f32 %v756, 0.0
        %v850 = vmax.f32 %v775, 0.0
        %v851 = vmax.f32 %v794, 0.0
        %v852 = vmax.f32 %v813, 0.0
        %v853 = vmax.f32 %v832, 0.0
        %v854 = vmax.f32 %v739, 0.0
        %v855 = vmax.f32 %v758, 0.0
        %v856 = vmax.f32 %v777, 0.0
        %v857 = vmax.f32 %v796, 0.0
        %v858 = vmax.f32 %v815, 0.0
        %v859 = vmax.f32 %v834, 0.0
        %v860 = vpack.c.bf16 %v837, %v836
        %v861 = vpack.c.bf16 %v839, %v838
        %v862 = vpack.c.bf16 %v841, %v840
        %v863 = vpack.c.bf16 %v843, %v842
        %v864 = vpack.c.bf16 %v845, %v844
        %v865 = vpack.c.bf16 %v847, %v846
        %v866 = vpack.c.bf16 %v849, %v848
        %v867 = vpack.c.bf16 %v851, %v850
        %v868 = vpack.c.bf16 %v853, %v852
        %v869 = vpack.c.bf16 %v855, %v854
        %v870 = vpack.c.bf16 %v857, %v856
        %v871 = vpack.c.bf16 %v859, %v858
        %873 = vset.pattern.permute.xlu0 0
        %874 = vperm.xlu0 %873, %v230
        %v875 = vpop.permute.xlu0 %874
        %878 = vset.pattern.permute.xlu0 0
        %879 = vperm.xlu0 %878, %v231
        %v880 = vpop.permute.xlu0 %879
        %883 = vset.pattern.permute.xlu0 0
        %884 = vperm.xlu0 %883, %v232
        %v885 = vpop.permute.xlu0 %884
        %888 = vset.pattern.permute.xlu0 0
        %889 = vperm.xlu0 %888, %v233
        %v890 = vpop.permute.xlu0 %889
        %v896 = vunpack.c.l.b16 %v211
        %v897 = vunpack.c.l.b16 %v212
        %v898 = vunpack.c.l.b16 %v213
        %v899 = vunpack.c.l.b16 %v214
        %v900 = vpack.c.b16 %v897, %v896
        %v901 = vpack.c.b16 %v899, %v898
        %v914 = vunpack.c.l.b16 %v860
        %v915 = vunpack.c.h.b16 %v860
        %v916 = vunpack.c.l.b16 %v861
        %v917 = vunpack.c.h.b16 %v861
        %v918 = vunpack.c.l.b16 %v862
        %v919 = vunpack.c.h.b16 %v862
        %v920 = vunpack.c.l.b16 %v863
        %v921 = vunpack.c.h.b16 %v863
        %v922 = vunpack.c.l.b16 %v864
        %v923 = vunpack.c.h.b16 %v864
        %v924 = vunpack.c.l.b16 %v865
        %v925 = vunpack.c.h.b16 %v865
        %v926 = vunpack.c.l.b16 %v866
        %v927 = vunpack.c.h.b16 %v866
        %v928 = vunpack.c.l.b16 %v867
        %v929 = vunpack.c.h.b16 %v867
        %v930 = vunpack.c.l.b16 %v868
        %v931 = vunpack.c.h.b16 %v868
        %v932 = vunpack.c.l.b16 %v869
        %v933 = vunpack.c.h.b16 %v869
        %v934 = vunpack.c.l.b16 %v870
        %v935 = vunpack.c.h.b16 %v870
        %v936 = vunpack.c.l.b16 %v871
        %v937 = vunpack.c.h.b16 %v871
        %v938 = vpack.c.b16 %v920, %v914
        %v939 = vpack.c.b16 %v921, %v915
        %v940 = vpack.c.b16 %v922, %v916
        %v941 = vpack.c.b16 %v923, %v917
        %v942 = vpack.c.b16 %v924, %v918
        %v943 = vpack.c.b16 %v925, %v919
        %v944 = vpack.c.b16 %v932, %v926
        %v945 = vpack.c.b16 %v933, %v927
        %v946 = vpack.c.b16 %v934, %v928
        %v947 = vpack.c.b16 %v935, %v929
        %v948 = vpack.c.b16 %v936, %v930
        %v949 = vpack.c.b16 %v937, %v931
        %vm962 = vcmask 261120
        %v964 = vsel %vm962, %v900, 0
        %v967 = vsel %vm962, %v901, 0
        %969 = vmatpush.bf16.msra.mxu0 0
        %970 = vmatpush.bf16.msra.mxu0 0
        %971 = vmatpush.bf16.msra.mxu0 0
        %972 = vmatpush.bf16.msra.mxu0 0
        %973 = vmatpush.bf16.msra.mxu0 0
        %974 = vmatpush.bf16.msra.mxu0 0
        %975 = vmatpush.bf16.msra.mxu0 %v944
        %976 = vmatpush.bf16.msra.mxu0 %v938
        %977 = vmatmul.bf16.gmra.mxu0 %v964
        %v978 = vpop.f32.mrf.mxu0
        %v979 = vadd.f32 %v875, %v978
        %v980 = vpop.f32.mrf.mxu0
        %v981 = vadd.f32 %v880, %v980
        %982 = vmatmul.bf16.gmra.mxu0 %v967
        %v983 = vpop.f32.mrf.mxu0
        %v984 = vadd.f32 %v885, %v983
        %v985 = vpop.f32.mrf.mxu0
        %v986 = vadd.f32 %v890, %v985
        %987 = vdwg.mxu0
        %988 = vmatpush.bf16.msra.mxu0 0
        %989 = vmatpush.bf16.msra.mxu0 0
        %990 = vmatpush.bf16.msra.mxu0 0
        %991 = vmatpush.bf16.msra.mxu0 0
        %992 = vmatpush.bf16.msra.mxu0 0
        %993 = vmatpush.bf16.msra.mxu0 0
        %994 = vmatpush.bf16.msra.mxu0 %v945
        %995 = vmatpush.bf16.msra.mxu0 %v939
        %996 = vmatmul.bf16.gmra.mxu0 %v964
        %v997 = vpop.f32.mrf.mxu0
        %v998 = vadd.f32 %v875, %v997
        %v999 = vpop.f32.mrf.mxu0
        %v1000 = vadd.f32 %v880, %v999
        %1001 = vmatmul.bf16.gmra.mxu0 %v967
        %v1002 = vpop.f32.mrf.mxu0
        %v1003 = vadd.f32 %v885, %v1002
        %v1004 = vpop.f32.mrf.mxu0
        %v1005 = vadd.f32 %v890, %v1004
        %1006 = vdwg.mxu0
        %1007 = vmatpush.bf16.msra.mxu0 0
        %1008 = vmatpush.bf16.msra.mxu0 0
        %1009 = vmatpush.bf16.msra.mxu0 0
        %1010 = vmatpush.bf16.msra.mxu0 0
        %1011 = vmatpush.bf16.msra.mxu0 0
        %1012 = vmatpush.bf16.msra.mxu0 0
        %1013 = vmatpush.bf16.msra.mxu0 %v946
        %1014 = vmatpush.bf16.msra.mxu0 %v940
        %1015 = vmatmul.bf16.gmra.mxu0 %v964
        %v1016 = vpop.f32.mrf.mxu0
        %v1017 = vadd.f32 %v875, %v1016
        %v1018 = vpop.f32.mrf.mxu0
        %v1019 = vadd.f32 %v880, %v1018
        %1020 = vmatmul.bf16.gmra.mxu0 %v967
        %v1021 = vpop.f32.mrf.mxu0
        %v1022 = vadd.f32 %v885, %v1021
        %v1023 = vpop.f32.mrf.mxu0
        %v1024 = vadd.f32 %v890, %v1023
        %1025 = vdwg.mxu0
        %1026 = vmatpush.bf16.msra.mxu0 0
        %1027 = vmatpush.bf16.msra.mxu0 0
        %1028 = vmatpush.bf16.msra.mxu0 0
        %1029 = vmatpush.bf16.msra.mxu0 0
        %1030 = vmatpush.bf16.msra.mxu0 0
        %1031 = vmatpush.bf16.msra.mxu0 0
        %1032 = vmatpush.bf16.msra.mxu0 %v947
        %1033 = vmatpush.bf16.msra.mxu0 %v941
        %1034 = vmatmul.bf16.gmra.mxu0 %v964
        %v1035 = vpop.f32.mrf.mxu0
        %v1036 = vadd.f32 %v875, %v1035
        %v1037 = vpop.f32.mrf.mxu0
        %v1038 = vadd.f32 %v880, %v1037
        %1039 = vmatmul.bf16.gmra.mxu0 %v967
        %v1040 = vpop.f32.mrf.mxu0
        %v1041 = vadd.f32 %v885, %v1040
        %v1042 = vpop.f32.mrf.mxu0
        %v1043 = vadd.f32 %v890, %v1042
        %1044 = vdwg.mxu0
        %1045 = vmatpush.bf16.msra.mxu0 0
        %1046 = vmatpush.bf16.msra.mxu0 0
        %1047 = vmatpush.bf16.msra.mxu0 0
        %1048 = vmatpush.bf16.msra.mxu0 0
        %1049 = vmatpush.bf16.msra.mxu0 0
        %1050 = vmatpush.bf16.msra.mxu0 0
        %1051 = vmatpush.bf16.msra.mxu0 %v948
        %1052 = vmatpush.bf16.msra.mxu0 %v942
        %1053 = vmatmul.bf16.gmra.mxu0 %v964
        %v1054 = vpop.f32.mrf.mxu0
        %v1055 = vadd.f32 %v875, %v1054
        %v1056 = vpop.f32.mrf.mxu0
        %v1057 = vadd.f32 %v880, %v1056
        %1058 = vmatmul.bf16.gmra.mxu0 %v967
        %v1059 = vpop.f32.mrf.mxu0
        %v1060 = vadd.f32 %v885, %v1059
        %v1061 = vpop.f32.mrf.mxu0
        %v1062 = vadd.f32 %v890, %v1061
        %1063 = vdwg.mxu0
        %1064 = vmatpush.bf16.msra.mxu0 0
        %1065 = vmatpush.bf16.msra.mxu0 0
        %1066 = vmatpush.bf16.msra.mxu0 0
        %1067 = vmatpush.bf16.msra.mxu0 0
        %1068 = vmatpush.bf16.msra.mxu0 0
        %1069 = vmatpush.bf16.msra.mxu0 0
        %1070 = vmatpush.bf16.msra.mxu0 %v949
        %1071 = vmatpush.bf16.msra.mxu0 %v943
        %1072 = vmatmul.bf16.gmra.mxu0 %v964
        %v1073 = vpop.f32.mrf.mxu0
        %v1074 = vadd.f32 %v875, %v1073
        %v1075 = vpop.f32.mrf.mxu0
        %v1076 = vadd.f32 %v880, %v1075
        %1077 = vmatmul.bf16.gmra.mxu0 %v967
        %v1078 = vpop.f32.mrf.mxu0
        %v1079 = vadd.f32 %v885, %v1078
        %v1080 = vpop.f32.mrf.mxu0
        %v1081 = vadd.f32 %v890, %v1080
        %1082 = vdwg.mxu0
        %v1083 = vmax.f32 %v979, 0.0
        %v1084 = vmax.f32 %v998, 0.0
        %v1085 = vmax.f32 %v1017, 0.0
        %v1086 = vmax.f32 %v1036, 0.0
        %v1087 = vmax.f32 %v1055, 0.0
        %v1088 = vmax.f32 %v1074, 0.0
        %v1089 = vmax.f32 %v981, 0.0
        %v1090 = vmax.f32 %v1000, 0.0
        %v1091 = vmax.f32 %v1019, 0.0
        %v1092 = vmax.f32 %v1038, 0.0
        %v1093 = vmax.f32 %v1057, 0.0
        %v1094 = vmax.f32 %v1076, 0.0
        %v1095 = vmax.f32 %v984, 0.0
        %v1096 = vmax.f32 %v1003, 0.0
        %v1097 = vmax.f32 %v1022, 0.0
        %v1098 = vmax.f32 %v1041, 0.0
        %v1099 = vmax.f32 %v1060, 0.0
        %v1100 = vmax.f32 %v1079, 0.0
        %v1101 = vmax.f32 %v986, 0.0
        %v1102 = vmax.f32 %v1005, 0.0
        %v1103 = vmax.f32 %v1024, 0.0
        %v1104 = vmax.f32 %v1043, 0.0
        %v1105 = vmax.f32 %v1062, 0.0
        %v1106 = vmax.f32 %v1081, 0.0
        %v1107 = vpack.c.bf16 %v1089, %v1083
        %v1108 = vpack.c.bf16 %v1090, %v1084
        %v1109 = vpack.c.bf16 %v1091, %v1085
        %v1110 = vpack.c.bf16 %v1092, %v1086
        %v1111 = vpack.c.bf16 %v1093, %v1087
        %v1112 = vpack.c.bf16 %v1094, %v1088
        %v1113 = vpack.c.bf16 %v1101, %v1095
        %v1114 = vpack.c.bf16 %v1102, %v1096
        %v1115 = vpack.c.bf16 %v1103, %v1097
        %v1116 = vpack.c.bf16 %v1104, %v1098
        %v1117 = vpack.c.bf16 %v1105, %v1099
        %v1118 = vpack.c.bf16 %v1106, %v1100
        %1120 = vset.pattern.permute.xlu0 0
        %1121 = vperm.xlu0 %1120, %v234
        %v1122 = vpop.permute.xlu0 %1121
        %1125 = vset.pattern.permute.xlu0 0
        %1126 = vperm.xlu0 %1125, %v235
        %v1127 = vpop.permute.xlu0 %1126
        %1130 = vset.pattern.permute.xlu0 0
        %1131 = vperm.xlu0 %1130, %v236
        %v1132 = vpop.permute.xlu0 %1131
        %1135 = vset.pattern.permute.xlu0 0
        %1136 = vperm.xlu0 %1135, %v237
        %v1137 = vpop.permute.xlu0 %1136
        %v1143 = vunpack.c.l.b16 %v215
        %v1144 = vunpack.c.l.b16 %v216
        %v1145 = vunpack.c.l.b16 %v217
        %v1146 = vunpack.c.l.b16 %v218
        %v1147 = vpack.c.b16 %v1144, %v1143
        %v1148 = vpack.c.b16 %v1146, %v1145
        %v1150 = vsel %vm962, %v1147, 0
        %v1153 = vsel %vm962, %v1148, 0
        %1155 = vmatpush.bf16.msra.mxu0 0
        %1156 = vmatpush.bf16.msra.mxu0 0
        %1157 = vmatpush.bf16.msra.mxu0 0
        %1158 = vmatpush.bf16.msra.mxu0 0
        %1159 = vmatpush.bf16.msra.mxu0 0
        %1160 = vmatpush.bf16.msra.mxu0 0
        %1161 = vmatpush.bf16.msra.mxu0 %v1113
        %1162 = vmatpush.bf16.msra.mxu0 %v1107
        %1163 = vmatmul.bf16.gmra.mxu0 %v1150
        %v1164 = vpop.f32.mrf.mxu0
        %v1165 = vadd.f32 %v1122, %v1164
        %v1166 = vpop.f32.mrf.mxu0
        %v1167 = vadd.f32 %v1127, %v1166
        %1168 = vmatmul.bf16.gmra.mxu0 %v1153
        %v1169 = vpop.f32.mrf.mxu0
        %v1170 = vadd.f32 %v1132, %v1169
        %v1171 = vpop.f32.mrf.mxu0
        %v1172 = vadd.f32 %v1137, %v1171
        %1173 = vdwg.mxu0
        %1174 = vmatpush.bf16.msra.mxu0 0
        %1175 = vmatpush.bf16.msra.mxu0 0
        %1176 = vmatpush.bf16.msra.mxu0 0
        %1177 = vmatpush.bf16.msra.mxu0 0
        %1178 = vmatpush.bf16.msra.mxu0 0
        %1179 = vmatpush.bf16.msra.mxu0 0
        %1180 = vmatpush.bf16.msra.mxu0 %v1114
        %1181 = vmatpush.bf16.msra.mxu0 %v1108
        %1182 = vmatmul.bf16.gmra.mxu0 %v1150
        %v1183 = vpop.f32.mrf.mxu0
        %v1184 = vadd.f32 %v1122, %v1183
        %v1185 = vpop.f32.mrf.mxu0
        %v1186 = vadd.f32 %v1127, %v1185
        %1187 = vmatmul.bf16.gmra.mxu0 %v1153
        %v1188 = vpop.f32.mrf.mxu0
        %v1189 = vadd.f32 %v1132, %v1188
        %v1190 = vpop.f32.mrf.mxu0
        %v1191 = vadd.f32 %v1137, %v1190
        %1192 = vdwg.mxu0
        %1193 = vmatpush.bf16.msra.mxu0 0
        %1194 = vmatpush.bf16.msra.mxu0 0
        %1195 = vmatpush.bf16.msra.mxu0 0
        %1196 = vmatpush.bf16.msra.mxu0 0
        %1197 = vmatpush.bf16.msra.mxu0 0
        %1198 = vmatpush.bf16.msra.mxu0 0
        %1199 = vmatpush.bf16.msra.mxu0 %v1115
        %1200 = vmatpush.bf16.msra.mxu0 %v1109
        %1201 = vmatmul.bf16.gmra.mxu0 %v1150
        %v1202 = vpop.f32.mrf.mxu0
        %v1203 = vadd.f32 %v1122, %v1202
        %v1204 = vpop.f32.mrf.mxu0
        %v1205 = vadd.f32 %v1127, %v1204
        %1206 = vmatmul.bf16.gmra.mxu0 %v1153
        %v1207 = vpop.f32.mrf.mxu0
        %v1208 = vadd.f32 %v1132, %v1207
        %v1209 = vpop.f32.mrf.mxu0
        %v1210 = vadd.f32 %v1137, %v1209
        %1211 = vdwg.mxu0
        %1212 = vmatpush.bf16.msra.mxu0 0
        %1213 = vmatpush.bf16.msra.mxu0 0
        %1214 = vmatpush.bf16.msra.mxu0 0
        %1215 = vmatpush.bf16.msra.mxu0 0
        %1216 = vmatpush.bf16.msra.mxu0 0
        %1217 = vmatpush.bf16.msra.mxu0 0
        %1218 = vmatpush.bf16.msra.mxu0 %v1116
        %1219 = vmatpush.bf16.msra.mxu0 %v1110
        %1220 = vmatmul.bf16.gmra.mxu0 %v1150
        %v1221 = vpop.f32.mrf.mxu0
        %v1222 = vadd.f32 %v1122, %v1221
        %v1223 = vpop.f32.mrf.mxu0
        %v1224 = vadd.f32 %v1127, %v1223
        %1225 = vmatmul.bf16.gmra.mxu0 %v1153
        %v1226 = vpop.f32.mrf.mxu0
        %v1227 = vadd.f32 %v1132, %v1226
        %v1228 = vpop.f32.mrf.mxu0
        %v1229 = vadd.f32 %v1137, %v1228
        %1230 = vdwg.mxu0
        %1231 = vmatpush.bf16.msra.mxu0 0
        %1232 = vmatpush.bf16.msra.mxu0 0
        %1233 = vmatpush.bf16.msra.mxu0 0
        %1234 = vmatpush.bf16.msra.mxu0 0
        %1235 = vmatpush.bf16.msra.mxu0 0
        %1236 = vmatpush.bf16.msra.mxu0 0
        %1237 = vmatpush.bf16.msra.mxu0 %v1117
        %1238 = vmatpush.bf16.msra.mxu0 %v1111
        %1239 = vmatmul.bf16.gmra.mxu0 %v1150
        %v1240 = vpop.f32.mrf.mxu0
        %v1241 = vadd.f32 %v1122, %v1240
        %v1242 = vpop.f32.mrf.mxu0
        %v1243 = vadd.f32 %v1127, %v1242
        %1244 = vmatmul.bf16.gmra.mxu0 %v1153
        %v1245 = vpop.f32.mrf.mxu0
        %v1246 = vadd.f32 %v1132, %v1245
        %v1247 = vpop.f32.mrf.mxu0
        %v1248 = vadd.f32 %v1137, %v1247
        %1249 = vdwg.mxu0
        %1250 = vmatpush.bf16.msra.mxu0 0
        %1251 = vmatpush.bf16.msra.mxu0 0
        %1252 = vmatpush.bf16.msra.mxu0 0
        %1253 = vmatpush.bf16.msra.mxu0 0
        %1254 = vmatpush.bf16.msra.mxu0 0
        %1255 = vmatpush.bf16.msra.mxu0 0
        %1256 = vmatpush.bf16.msra.mxu0 %v1118
        %1257 = vmatpush.bf16.msra.mxu0 %v1112
        %1258 = vmatmul.bf16.gmra.mxu0 %v1150
        %v1259 = vpop.f32.mrf.mxu0
        %v1260 = vadd.f32 %v1122, %v1259
        %v1261 = vpop.f32.mrf.mxu0
        %v1262 = vadd.f32 %v1127, %v1261
        %1263 = vmatmul.bf16.gmra.mxu0 %v1153
        %v1264 = vpop.f32.mrf.mxu0
        %v1265 = vadd.f32 %v1132, %v1264
        %v1266 = vpop.f32.mrf.mxu0
        %v1267 = vadd.f32 %v1137, %v1266
        %1268 = vdwg.mxu0
        %v1269 = vunpack.c.l.bf16 %v860
        %v1270 = vunpack.c.h.bf16 %v860
        %v1271 = vunpack.c.l.bf16 %v861
        %v1272 = vunpack.c.h.bf16 %v861
        %v1273 = vunpack.c.l.bf16 %v862
        %v1274 = vunpack.c.h.bf16 %v862
        %v1275 = vunpack.c.l.bf16 %v863
        %v1276 = vunpack.c.h.bf16 %v863
        %v1277 = vunpack.c.l.bf16 %v864
        %v1278 = vunpack.c.h.bf16 %v864
        %v1279 = vunpack.c.l.bf16 %v865
        %v1280 = vunpack.c.h.bf16 %v865
        %v1281 = vunpack.c.l.bf16 %v866
        %v1282 = vunpack.c.h.bf16 %v866
        %v1283 = vunpack.c.l.bf16 %v867
        %v1284 = vunpack.c.h.bf16 %v867
        %v1285 = vunpack.c.l.bf16 %v868
        %v1286 = vunpack.c.h.bf16 %v868
        %v1287 = vunpack.c.l.bf16 %v869
        %v1288 = vunpack.c.h.bf16 %v869
        %v1289 = vunpack.c.l.bf16 %v870
        %v1290 = vunpack.c.h.bf16 %v870
        %v1291 = vunpack.c.l.bf16 %v871
        %v1292 = vunpack.c.h.bf16 %v871
        %v1293 = vadd.f32 %v1269, %v1165
        %v1294 = vadd.f32 %v1270, %v1184
        %v1295 = vadd.f32 %v1271, %v1203
        %v1296 = vadd.f32 %v1272, %v1222
        %v1297 = vadd.f32 %v1273, %v1241
        %v1298 = vadd.f32 %v1274, %v1260
        %v1299 = vadd.f32 %v1275, %v1167
        %v1300 = vadd.f32 %v1276, %v1186
        %v1301 = vadd.f32 %v1277, %v1205
        %v1302 = vadd.f32 %v1278, %v1224
        %v1303 = vadd.f32 %v1279, %v1243
        %v1304 = vadd.f32 %v1280, %v1262
        %v1305 = vadd.f32 %v1281, %v1170
        %v1306 = vadd.f32 %v1282, %v1189
        %v1307 = vadd.f32 %v1283, %v1208
        %v1308 = vadd.f32 %v1284, %v1227
        %v1309 = vadd.f32 %v1285, %v1246
        %v1310 = vadd.f32 %v1286, %v1265
        %v1311 = vadd.f32 %v1287, %v1172
        %v1312 = vadd.f32 %v1288, %v1191
        %v1313 = vadd.f32 %v1289, %v1210
        %v1314 = vadd.f32 %v1290, %v1229
        %v1315 = vadd.f32 %v1291, %v1248
        %v1316 = vadd.f32 %v1292, %v1267
        %v1317 = vmax.f32 %v1293, 0.0
        %v1318 = vmax.f32 %v1294, 0.0
        %v1319 = vmax.f32 %v1295, 0.0
        %v1320 = vmax.f32 %v1296, 0.0
        %v1321 = vmax.f32 %v1297, 0.0
        %v1322 = vmax.f32 %v1298, 0.0
        %v1323 = vmax.f32 %v1299, 0.0
        %v1324 = vmax.f32 %v1300, 0.0
        %v1325 = vmax.f32 %v1301, 0.0
        %v1326 = vmax.f32 %v1302, 0.0
        %v1327 = vmax.f32 %v1303, 0.0
        %v1328 = vmax.f32 %v1304, 0.0
        %v1329 = vmax.f32 %v1305, 0.0
        %v1330 = vmax.f32 %v1306, 0.0
        %v1331 = vmax.f32 %v1307, 0.0
        %v1332 = vmax.f32 %v1308, 0.0
        %v1333 = vmax.f32 %v1309, 0.0
        %v1334 = vmax.f32 %v1310, 0.0
        %v1335 = vmax.f32 %v1311, 0.0
        %v1336 = vmax.f32 %v1312, 0.0
        %v1337 = vmax.f32 %v1313, 0.0
        %v1338 = vmax.f32 %v1314, 0.0
        %v1339 = vmax.f32 %v1315, 0.0
        %v1340 = vmax.f32 %v1316, 0.0
        %v1341 = vpack.c.bf16 %v1323, %v1317
        %v1342 = vpack.c.bf16 %v1324, %v1318
        %v1343 = vpack.c.bf16 %v1325, %v1319
        %v1344 = vpack.c.bf16 %v1326, %v1320
        %v1345 = vpack.c.bf16 %v1327, %v1321
        %v1346 = vpack.c.bf16 %v1328, %v1322
        %v1347 = vpack.c.bf16 %v1335, %v1329
        %v1348 = vpack.c.bf16 %v1336, %v1330
        %v1349 = vpack.c.bf16 %v1337, %v1331
        %v1350 = vpack.c.bf16 %v1338, %v1332
        %v1351 = vpack.c.bf16 %v1339, %v1333
        %v1352 = vpack.c.bf16 %v1340, %v1334
        %1354 = vset.pattern.permute.xlu0 0
        %1355 = vperm.xlu0 %1354, %v238
        %v1356 = vpop.permute.xlu0 %1355
        %v1359 = vsel %vm962, %v219, 0
        %1361 = vmatpush.bf16.msra.mxu0 0
        %1362 = vmatpush.bf16.msra.mxu0 0
        %1363 = vmatpush.bf16.msra.mxu0 0
        %1364 = vmatpush.bf16.msra.mxu0 0
        %1365 = vmatpush.bf16.msra.mxu0 0
        %1366 = vmatpush.bf16.msra.mxu0 0
        %1367 = vmatpush.bf16.msra.mxu0 %v1347
        %1368 = vmatpush.bf16.msra.mxu0 %v1341
        %1369 = vmatmul.bf16.gmra.mxu0 %v1359
        %v1370 = vpop.f32.mrf.mxu0
        %v1371 = vadd.f32 %v1356, %v1370
        %v1372 = vpop.f32.mrf.mxu0
        %1373 = vdwg.mxu0
        %1374 = vmatpush.bf16.msra.mxu0 0
        %1375 = vmatpush.bf16.msra.mxu0 0
        %1376 = vmatpush.bf16.msra.mxu0 0
        %1377 = vmatpush.bf16.msra.mxu0 0
        %1378 = vmatpush.bf16.msra.mxu0 0
        %1379 = vmatpush.bf16.msra.mxu0 0
        %1380 = vmatpush.bf16.msra.mxu0 %v1348
        %1381 = vmatpush.bf16.msra.mxu0 %v1342
        %1382 = vmatmul.bf16.gmra.mxu0 %v1359
        %v1383 = vpop.f32.mrf.mxu0
        %v1384 = vadd.f32 %v1356, %v1383
        %v1385 = vpop.f32.mrf.mxu0
        %1386 = vdwg.mxu0
        %1387 = vmatpush.bf16.msra.mxu0 0
        %1388 = vmatpush.bf16.msra.mxu0 0
        %1389 = vmatpush.bf16.msra.mxu0 0
        %1390 = vmatpush.bf16.msra.mxu0 0
        %1391 = vmatpush.bf16.msra.mxu0 0
        %1392 = vmatpush.bf16.msra.mxu0 0
        %1393 = vmatpush.bf16.msra.mxu0 %v1349
        %1394 = vmatpush.bf16.msra.mxu0 %v1343
        %1395 = vmatmul.bf16.gmra.mxu0 %v1359
        %v1396 = vpop.f32.mrf.mxu0
        %v1397 = vadd.f32 %v1356, %v1396
        %v1398 = vpop.f32.mrf.mxu0
        %1399 = vdwg.mxu0
        %1400 = vmatpush.bf16.msra.mxu0 0
        %1401 = vmatpush.bf16.msra.mxu0 0
        %1402 = vmatpush.bf16.msra.mxu0 0
        %1403 = vmatpush.bf16.msra.mxu0 0
        %1404 = vmatpush.bf16.msra.mxu0 0
        %1405 = vmatpush.bf16.msra.mxu0 0
        %1406 = vmatpush.bf16.msra.mxu0 %v1350
        %1407 = vmatpush.bf16.msra.mxu0 %v1344
        %1408 = vmatmul.bf16.gmra.mxu0 %v1359
        %v1409 = vpop.f32.mrf.mxu0
        %v1410 = vadd.f32 %v1356, %v1409
        %v1411 = vpop.f32.mrf.mxu0
        %1412 = vdwg.mxu0
        %1413 = vmatpush.bf16.msra.mxu0 0
        %1414 = vmatpush.bf16.msra.mxu0 0
        %1415 = vmatpush.bf16.msra.mxu0 0
        %1416 = vmatpush.bf16.msra.mxu0 0
        %1417 = vmatpush.bf16.msra.mxu0 0
        %1418 = vmatpush.bf16.msra.mxu0 0
        %1419 = vmatpush.bf16.msra.mxu0 %v1351
        %1420 = vmatpush.bf16.msra.mxu0 %v1345
        %1421 = vmatmul.bf16.gmra.mxu0 %v1359
        %v1422 = vpop.f32.mrf.mxu0
        %v1423 = vadd.f32 %v1356, %v1422
        %v1424 = vpop.f32.mrf.mxu0
        %1425 = vdwg.mxu0
        %1426 = vmatpush.bf16.msra.mxu0 0
        %1427 = vmatpush.bf16.msra.mxu0 0
        %1428 = vmatpush.bf16.msra.mxu0 0
        %1429 = vmatpush.bf16.msra.mxu0 0
        %1430 = vmatpush.bf16.msra.mxu0 0
        %1431 = vmatpush.bf16.msra.mxu0 0
        %1432 = vmatpush.bf16.msra.mxu0 %v1352
        %1433 = vmatpush.bf16.msra.mxu0 %v1346
        %1434 = vmatmul.bf16.gmra.mxu0 %v1359
        %v1435 = vpop.f32.mrf.mxu0
        %v1436 = vadd.f32 %v1356, %v1435
        %v1437 = vpop.f32.mrf.mxu0
        %1438 = vdwg.mxu0
        %1439 = vst [vmem:[%s188] sm:$0xff] %v1371
        %1440 = vst [vmem:[%s188 + $0x8] sm:$0xff] %v1384
        %1441 = vst [vmem:[%s188 + $0x10] sm:$0xff] %v1397
        %1442 = vst [vmem:[%s188 + $0x18] sm:$0xff] %v1410
        %1443 = vst [vmem:[%s188 + $0x20] sm:$0xff] %v1423
        %1444 = vst [vmem:[%s188 + $0x28] sm:$0xff] %v1436
        %s1445 = sand.u32 %s109, 1
        %s1446 = scalar_lea.sflag [#allocation3], %s1445
        %s1447 = sand.u32 %s109, 1
        %s1448 = smul.addr %s1447, 48
        %s1449 = scalar_lea.vmem [#allocation2], %s1448
        // Predicated region
        $region33: #{tpu_custom_call.1} parent=31 // pred_check
          %p1450 = pneg %p119
        $region34: #{tpu_custom_call.1} parent=31 // pred_check_branch
          %1452 = sbr.rel (%p1450) target = $region36
        $region35: #{tpu_custom_call.1} parent=31 // pred_region
          %s1453 = smul.u32 6, %s22
          %1455 = vsyncadd %s1446, 0
          %s1456 = smul.addr %s21, 6
          %s1457 = sadd.s32 %s1453, %s1456
          %s1458 = smul.addr %s1457, 8
          %s1459 = scalar_lea.hbm %s3, %s1458
          %s1461 = sshll.u32 %s1449, 4
          %s1462 = int_to_ptr.vmem [resolvable:$true] %s1461
          %s1463 = sshll.u32 %s1459, 4
          %s1464 = int_to_ptr.hbm [resolvable:$true] %s1463
          %1466 = dma.vmem_to_hbm [thread:$0]  %s1462, 768, %s1464, %s1446
        $region36: #{tpu_custom_call.1} parent=31 // pred_fallthru
          _
      $region32: #{tpu_custom_call.1} parent=5 // pred_fallthru
        _
      %p1467 = scmp.le.s32.totalorder 2, %s12
      // Predicated region
      $region37: #{tpu_custom_call.1} parent=5 // pred_check
        %p1468 = pneg %p1467
      $region38: #{tpu_custom_call.1} parent=5 // pred_check_branch
        %1470 = sbr.rel (%p1468) target = $region40
      $region39: #{tpu_custom_call.1} parent=5 // pred_region
        %s1471 = ssub.s32 %s12, 2
        // Predicated region
        $region41: #{tpu_custom_call.1} parent=39 // pred_check
          %p1472 = pneg %p125
        $region42: #{tpu_custom_call.1} parent=39 // pred_check_branch
          %1474 = sbr.rel (%p1472) target = $region44
        $region43: #{tpu_custom_call.1} parent=39 // pred_region
          %s1475 = sand.u32 %s110, 1
          %s1476 = scalar_lea.sflag [#allocation3], %s1475
          %s1477 = sand.u32 %s110, 1
          %s1478 = smul.addr %s1477, 48
          %s1479 = scalar_lea.vmem [#allocation2], %s1478
          %1481 = dma.done %s1476, 768
        $region44: #{tpu_custom_call.1} parent=39 // pred_fallthru
          _
      $region40: #{tpu_custom_call.1} parent=5 // pred_fallthru
        _
    $region6: #{tpu_custom_call.1} parent=1 // loop_footer
      %s16 = sadd.s32 1, %s12
    $region7: #{tpu_custom_call.1} parent=1 // loop_footer_branch
      %11 = sbr.rel target = $region3
    $region8: #{tpu_custom_call.1} parent=1 // loop_exit
      _
    %1482 = vsyncpa [#allocation3], 1
    %s1483 = scalar_lea.sflag [#allocation3], 1
    %1484 = vsyncpa %s1483, 1

</llo_original>
